<compile_context>
chip_gen: v5e
topology: v5e:2x2
jax: 0.10.0
libtpu: 0.0.40
codegen_flags: <defaults>
</compile_context>

<pallas_src>
import jax
import jax.numpy as jnp
from jax.experimental import pallas as pl
from jax.experimental.pallas import tpu as pltpu

NEG_SLOPE = 0.01  # torch.nn.functional.leaky_relu default negative_slope
LANE = 128
SUBLANE = 8


def _cdiv(a, b):
    return -(-a // b)


def _round_up(x, m):
    return _cdiv(x, m) * m


def _leaky_relu(x):
    return jnp.where(x > 0, x, NEG_SLOPE * x)


def _pad2d(a, rows, cols):
    r, c = a.shape
    if r == rows and c == cols:
        return a  # skip the HBM round trip when already aligned
    return jnp.pad(a, ((0, rows - r), (0, cols - c)))


def _vmem_capacity_bytes():
    try:
        return int(pltpu.get_tpu_info().vmem_capacity_bytes)
    except Exception:
        return 64 << 20  # conservative fallback (v7x per-TensorCore)


def _bspec(shape, index_map, mode=None):
    if mode is None:
        return pl.BlockSpec(shape, index_map)
    return pl.BlockSpec(shape, index_map, pipeline_mode=mode)


def _make_mlp_kernel(compute_dtype):
    """compute_dtype=None -> matmul in input dtype; else cast dot operands (f32 acc)."""

    def mlp_kernel(x_ref, w1_ref, b1_ref, w2_ref, b2_ref, o_ref, acc_ref):
        k = pl.program_id(1)

        @pl.when(k == 0)
        def _():
            acc_ref[...] = jnp.zeros_like(acc_ref)

        x = x_ref[...]
        w1 = w1_ref[...]
        w2 = w2_ref[...]
        if compute_dtype is not None:
            x = x.astype(compute_dtype)
            w1 = w1.astype(compute_dtype)
            w2 = w2.astype(compute_dtype)

        # fc1 chunk: [tb, n_in_p] @ [n_in_p, tk] -> f32, + bias, leaky_relu.
        # Exact per chunk: the n_in contraction is never split across chunks.
        h = jnp.dot(x, w1, preferred_element_type=jnp.float32)
        h = _leaky_relu(h + b1_ref[...])

        # fc2 chunk: accumulate [tb, tk] @ [tk, n_out_p] into the f32 scratch.
        acc_ref[...] += jnp.dot(h.astype(w2.dtype), w2,
                                preferred_element_type=jnp.float32)

        @pl.when(k == pl.num_programs(1) - 1)
        def _():
            y = _leaky_relu(acc_ref[...] + b2_ref[...])
            o_ref[...] = y.astype(o_ref.dtype)

    return mlp_kernel


def mlp_forward(x, w1, b1, w2, b2, *, block_b=512, compute_dtype=None,
                hidden_chunk=None):
    """x: [B, n_in]; w1: [n_in, n_hid]; b1: [1, n_hid]; w2: [n_hid, n_out]; b2: [1, n_out]."""
    B, n_in = x.shape
    n_in_w, n_hid = w1.shape
    n_hid_w, n_out = w2.shape
    assert n_in_w == n_in and n_hid_w == n_hid

    # Lane alignment: 128; 256 for large dims so the v6e/v7x 256x256 MXU fills.
    def _feat_align(d):
        return 256 if d >= 1024 else LANE

    n_in_p = _round_up(n_in, _feat_align(n_in))
    n_out_p = _round_up(n_out, _feat_align(n_out))
    hid_align = _feat_align(n_hid)
    n_hid_p = _round_up(n_hid, hid_align)

    # Batch tile: always a multiple of 8 sublanes; shrink so the batch grid has
    # >= 2 tiles (both TensorCores on multi-core chips) when the batch allows.
    tb = min(_round_up(block_b, SUBLANE), _round_up(B, SUBLANE))
    if B >= 256 and _cdiv(B, tb) < 2:
        tb = _round_up(_cdiv(B, 2), SUBLANE)
    num_b = _cdiv(B, tb)  # no batch padding: partial last tile is masked

    dt = x.dtype
    isz = jnp.dtype(dt).itemsize
    cisz = jnp.dtype(compute_dtype).itemsize if compute_dtype is not None else isz

    vmem_cap = _vmem_capacity_bytes()
    budget = int(0.85 * vmem_cap)  # headroom for compiler scratch / semaphores

    def _footprint(tk, wbuf):
        return (
            2 * tb * n_in_p * isz                              # x tile (dbl buf)
            + wbuf * (n_in_p * tk + tk * n_out_p + tk) * isz   # w1, w2, b1 chunks
            + n_out_p * isz                                    # b2 (resident)
            + 2 * tb * n_out_p * isz                           # out tile (dbl buf)
            + tb * n_out_p * 4                                 # fc2 f32 accumulator
            + tb * tk * 4                                      # fc1 f32 activation
            + tb * (n_in_p + tk) * cisz                        # cast temporaries
            + (2 << 20)                                        # slack
        )

    # Hidden-chunk size: largest aligned chunk whose per-step footprint fits.
    if hidden_chunk is not None:
        tk_hid = min(_round_up(hidden_chunk, hid_align), n_hid_p)
    else:
        cand, c = [n_hid_p], n_hid_p
        while c > hid_align:
            c = max(hid_align, _round_up(c // 2, hid_align))
            cand.append(c)
        tk_hid = cand[-1]
        for c in cand:
            if _footprint(c, 1 if c == n_hid_p else 2) <= budget:
                tk_hid = c
                break
    num_k = _cdiv(n_hid_p, tk_hid)
    n_hid_p = tk_hid * num_k  # re-pad so chunks tile exactly (zero pad is exact)
    resident = num_k == 1

    x_p = _pad2d(x, B, n_in_p)
    w1_p = _pad2d(w1, n_in_p, n_hid_p)
    b1_p = _pad2d(b1.reshape(1, n_hid), 1, n_hid_p)
    w2_p = _pad2d(w2, n_hid_p, n_out_p)
    b2_p = _pad2d(b2.reshape(1, n_out), 1, n_out_p)

    flops = 2 * num_b * tb * (n_in_p * n_hid_p + n_hid_p * n_out_p)
    bytes_accessed = isz * (
        B * n_in_p + n_in_p * n_hid_p + n_hid_p
        + n_hid_p * n_out_p + n_out_p + B * n_out_p)
    cost = pl.CostEstimate(flops=flops, transcendentals=0,
                           bytes_accessed=bytes_accessed)

    kernel = _make_mlp_kernel(compute_dtype)

    def _build(single_buffer_resident):
        w_mode = pl.Buffered(1) if (single_buffer_resident and resident) else None
        b2_mode = pl.Buffered(1) if single_buffer_resident else None
        wbuf = 1 if (single_buffer_resident and resident) else 2
        vmem_bytes = int(min(max(_footprint(tk_hid, wbuf), 4 << 20), budget))
        return pl.pallas_call(
            kernel,
            out_shape=jax.ShapeDtypeStruct((B, n_out_p), dt),
            grid_spec=pltpu.PrefetchScalarGridSpec(
                num_scalar_prefetch=0,
                grid=(num_b, num_k),
                in_specs=[
                    _bspec((tb, n_in_p), lambda i, k: (i, 0)),               # x
                    _bspec((n_in_p, tk_hid), lambda i, k: (0, k), w_mode),   # w1
                    _bspec((1, tk_hid), lambda i, k: (0, k), w_mode),        # b1
                    _bspec((tk_hid, n_out_p), lambda i, k: (k, 0), w_mode),  # w2
                    _bspec((1, n_out_p), lambda i, k: (0, 0), b2_mode),      # b2
                ],
                out_specs=pl.BlockSpec((tb, n_out_p), lambda i, k: (i, 0)),
                scratch_shapes=[pltpu.VMEM((tb, n_out_p), jnp.float32)],
            ),
            compiler_params=pltpu.CompilerParams(
                dimension_semantics=("parallel", "arbitrary"),
                vmem_limit_bytes=vmem_bytes,
            ),
            cost_estimate=cost,
        )

    try:
        out_p = _build(True)(x_p, w1_p, b1_p, w2_p, b2_p)
    except Exception:
        # Fallback if this JAX build rejects single-buffered (Buffered(1)) specs.
        out_p = _build(False)(x_p, w1_p, b1_p, w2_p, b2_p)

    if n_out_p == n_out:
        return out_p
    return out_p[:, :n_out]


def init_params(key, n_in, n_hid, n_out, dtype=jnp.float32):
    """Deterministic init mimicking nn.Linear defaults (U(+-1/sqrt(fan_in)))."""
    k1, k2, k3, k4 = jax.random.split(key, 4)
    lim1 = 1.0 / jnp.sqrt(jnp.float32(n_in))
    lim2 = 1.0 / jnp.sqrt(jnp.float32(n_hid))
    # Stored transposed relative to PyTorch's [out_features, in_features].
    w1 = jax.random.uniform(k1, (n_in, n_hid), dtype, -lim1, lim1)
    b1 = jax.random.uniform(k2, (1, n_hid), dtype, -lim1, lim1)
    w2 = jax.random.uniform(k3, (n_hid, n_out), dtype, -lim2, lim2)
    b2 = jax.random.uniform(k4, (1, n_out), dtype, -lim2, lim2)
    return w1, b1, w2, b2


def _reference(x, w1, b1, w2, b2):
    h = _leaky_relu(x @ w1 + b1)
    return _leaky_relu(h @ w2 + b2)


if __name__ == "__main__":
    key = jax.random.PRNGKey(0)
    k1, k2, k3, k4 = jax.random.split(key, 4)

    # Case 1: small MLP, fully-resident single-chunk path; grid=(2, 1) so both
    # TensorCores on a multi-core chip get a batch tile.
    B, n_in, n_hid, n_out = 256, 32, 64, 16
    x = jax.random.normal(k1, (B, n_in), jnp.float32)
    w1, b1, w2, b2 = init_params(k2, n_in, n_hid, n_out)
    out = jax.block_until_ready(mlp_forward(x, w1, b1, w2, b2, block_b=128))
    ref = _reference(x, w1, b1, w2, b2)
    assert out.shape == (B, n_out)
    assert jnp.allclose(out, ref, atol=1e-4, rtol=1e-4), \
        float(jnp.max(jnp.abs(out - ref)))

    # Case 2: unaligned dims + partial batch tile + forced hidden chunking,
    # exercising the pl.when-gated accumulator path.
    B2, n_in2, n_hid2, n_out2 = 100, 20, 384, 24
    x2 = jax.random.normal(k3, (B2, n_in2), jnp.float32)
    p2 = init_params(k4, n_in2, n_hid2, n_out2)
    out2 = jax.block_until_ready(
        mlp_forward(x2, *p2, block_b=64, hidden_chunk=128))
    ref2 = _reference(x2, *p2)
    assert out2.shape == (B2, n_out2)
    assert jnp.allclose(out2, ref2, atol=1e-4, rtol=1e-4), \
        float(jnp.max(jnp.abs(out2 - ref2)))

    print("KERNEL_OK")
</pallas_src>

<mosaic_0001>
module attributes {stable_mosaic.version = 11 : i64} {
  func.func @mlp_kernel(%arg0: i32, %arg1: i32, %arg2: memref<128x128xf32, #tpu.memory_space<vmem>>, %arg3: memref<128x128xf32, #tpu.memory_space<vmem>>, %arg4: memref<1x128xf32, #tpu.memory_space<vmem>>, %arg5: memref<128x128xf32, #tpu.memory_space<vmem>>, %arg6: memref<1x128xf32, #tpu.memory_space<vmem>>, %arg7: memref<128x128xf32, #tpu.memory_space<vmem>>, %arg8: memref<128x128xf32, #tpu.memory_space<vmem>>) attributes {dimension_semantics = [#tpu.dimension_semantics<parallel>, #tpu.dimension_semantics<arbitrary>], iteration_bounds = array<i64: 2, 1>, scalar_prefetch = 0 : i64, scratch_operands = 1 : i64, tpu.core_type = #tpu.core_type<tc>, window_params = [{transform_indices = @transform_0, window_bounds = array<i64: 128, 128>}, {pipeline_mode = #tpu.pipeline_mode<synchronous>, transform_indices = @transform_1, window_bounds = array<i64: 128, 128>}, {pipeline_mode = #tpu.pipeline_mode<synchronous>, transform_indices = @transform_2, window_bounds = array<i64: 1, 128>}, {pipeline_mode = #tpu.pipeline_mode<synchronous>, transform_indices = @transform_3, window_bounds = array<i64: 128, 128>}, {pipeline_mode = #tpu.pipeline_mode<synchronous>, transform_indices = @transform_4, window_bounds = array<i64: 1, 128>}, {transform_indices = @transform_5, window_bounds = array<i64: 128, 128>}]} {
    %c0_i32 = arith.constant 0 : i32
    %0 = arith.cmpi eq, %arg1, %c0_i32 : i32
    %1 = arith.extui %0 : i1 to i32
    %c0_i32_0 = arith.constant 0 : i32
    %2 = arith.cmpi ne, %1, %c0_i32_0 : i32
    scf.if %2 {
      %cst_17 = arith.constant 0.000000e+00 : f32
      %22 = vector.broadcast %cst_17 : f32 to vector<128x128xf32>
      %c0_18 = arith.constant 0 : index
      %c0_19 = arith.constant 0 : index
      %23 = vector.load %arg8[%c0_18, %c0_19] : memref<128x128xf32, #tpu.memory_space<vmem>>, vector<128x128xf32>
      tpu.vector_store %arg8[%c0_18, %c0_19], %22 {strides = array<i32>} : memref<128x128xf32, #tpu.memory_space<vmem>>, vector<128x128xf32>,
    } else {
    }
    %c0 = arith.constant 0 : index
    %c0_1 = arith.constant 0 : index
    %3 = vector.load %arg2[%c0, %c0_1] : memref<128x128xf32, #tpu.memory_space<vmem>>, vector<128x128xf32>
    %c0_2 = arith.constant 0 : index
    %c0_3 = arith.constant 0 : index
    %4 = vector.load %arg3[%c0_2, %c0_3] : memref<128x128xf32, #tpu.memory_space<vmem>>, vector<128x128xf32>
    %c0_4 = arith.constant 0 : index
    %c0_5 = arith.constant 0 : index
    %5 = vector.load %arg5[%c0_4, %c0_5] : memref<128x128xf32, #tpu.memory_space<vmem>>, vector<128x128xf32>
    %cst = arith.constant dense<0.000000e+00> : vector<128x128xf32>
    %6 = tpu.matmul %3, %4, %cst {dimension_numbers = #tpu.dot_dimension_numbers<[1], [0], [0], [1], [0, 0, 1, 1], [], []>} : vector<128x128xf32>, vector<128x128xf32>, vector<128x128xf32> -> vector<128x128xf32>
    %c0_6 = arith.constant 0 : index
    %c0_7 = arith.constant 0 : index
    %7 = vector.load %arg4[%c0_6, %c0_7] : memref<1x128xf32, #tpu.memory_space<vmem>>, vector<1x128xf32>
    %8 = vector.broadcast %7 : vector<1x128xf32> to vector<128x128xf32>
    %9 = arith.addf %6, %8 : vector<128x128xf32>
    %cst_8 = arith.constant 0.000000e+00 : f32
    %10 = vector.broadcast %cst_8 : f32 to vector<128x128xf32>
    %11 = arith.cmpf ogt, %9, %10 : vector<128x128xf32>
    %cst_9 = arith.constant 0.00999999977 : f32
    %12 = vector.broadcast %cst_9 : f32 to vector<128x128xf32>
    %13 = arith.mulf %12, %9 : vector<128x128xf32>
    %14 = arith.select %11, %9, %13 : vector<128x128xi1>, vector<128x128xf32>
    %c0_10 = arith.constant 0 : index
    %c0_11 = arith.constant 0 : index
    %15 = vector.load %arg8[%c0_10, %c0_11] : memref<128x128xf32, #tpu.memory_space<vmem>>, vector<128x128xf32>
    %cst_12 = arith.constant dense<0.000000e+00> : vector<128x128xf32>
    %16 = tpu.matmul %14, %5, %cst_12 {dimension_numbers = #tpu.dot_dimension_numbers<[1], [0], [0], [1], [0, 0, 1, 1], [], []>} : vector<128x128xf32>, vector<128x128xf32>, vector<128x128xf32> -> vector<128x128xf32>
    %17 = arith.addf %15, %16 : vector<128x128xf32>
    %c0_13 = arith.constant 0 : index
    %c0_14 = arith.constant 0 : index
    %18 = vector.load %arg8[%c0_13, %c0_14] : memref<128x128xf32, #tpu.memory_space<vmem>>, vector<128x128xf32>
    tpu.vector_store %arg8[%c0_13, %c0_14], %17 {strides = array<i32>} : memref<128x128xf32, #tpu.memory_space<vmem>>, vector<128x128xf32>,
    %c0_i32_15 = arith.constant 0 : i32
    %19 = arith.cmpi eq, %arg1, %c0_i32_15 : i32
    %20 = arith.extui %19 : i1 to i32
    %c0_i32_16 = arith.constant 0 : i32
    %21 = arith.cmpi ne, %20, %c0_i32_16 : i32
    scf.if %21 {
      %c0_17 = arith.constant 0 : index
      %c0_18 = arith.constant 0 : index
      %22 = vector.load %arg8[%c0_17, %c0_18] : memref<128x128xf32, #tpu.memory_space<vmem>>, vector<128x128xf32>
      %c0_19 = arith.constant 0 : index
      %c0_20 = arith.constant 0 : index
      %23 = vector.load %arg6[%c0_19, %c0_20] : memref<1x128xf32, #tpu.memory_space<vmem>>, vector<1x128xf32>
      %24 = vector.broadcast %23 : vector<1x128xf32> to vector<128x128xf32>
      %25 = arith.addf %22, %24 : vector<128x128xf32>
      %cst_21 = arith.constant 0.000000e+00 : f32
      %26 = vector.broadcast %cst_21 : f32 to vector<128x128xf32>
      %27 = arith.cmpf ogt, %25, %26 : vector<128x128xf32>
      %cst_22 = arith.constant 0.00999999977 : f32
      %28 = vector.broadcast %cst_22 : f32 to vector<128x128xf32>
      %29 = arith.mulf %28, %25 : vector<128x128xf32>
      %30 = arith.select %27, %25, %29 : vector<128x128xi1>, vector<128x128xf32>
      %c0_23 = arith.constant 0 : index
      %c0_24 = arith.constant 0 : index
      %31 = vector.load %arg7[%c0_23, %c0_24] : memref<128x128xf32, #tpu.memory_space<vmem>>, vector<128x128xf32>
      tpu.vector_store %arg7[%c0_23, %c0_24], %30 {strides = array<i32>} : memref<128x128xf32, #tpu.memory_space<vmem>>, vector<128x128xf32>,
    } else {
    }
    return
  }
  func.func @transform_0(%arg0: i32, %arg1: i32) -> (i32, i32) {
    %c0_i32 = arith.constant 0 : i32
    %c0_i32_0 = arith.constant 0 : i32
    return %arg0, %c0_i32 : i32, i32
  }
  func.func @transform_1(%arg0: i32, %arg1: i32) -> (i32, i32) {
    %c0_i32 = arith.constant 0 : i32
    %c0_i32_0 = arith.constant 0 : i32
    return %c0_i32, %arg1 : i32, i32
  }
  func.func @transform_2(%arg0: i32, %arg1: i32) -> (i32, i32) {
    %c0_i32 = arith.constant 0 : i32
    %c0_i32_0 = arith.constant 0 : i32
    return %c0_i32, %arg1 : i32, i32
  }
  func.func @transform_3(%arg0: i32, %arg1: i32) -> (i32, i32) {
    %c0_i32 = arith.constant 0 : i32
    %c0_i32_0 = arith.constant 0 : i32
    return %arg1, %c0_i32 : i32, i32
  }
  func.func @transform_4(%arg0: i32, %arg1: i32) -> (i32, i32) {
    %c0_i32 = arith.constant 0 : i32
    %c0_i32_0 = arith.constant 0 : i32
    %c0_i32_1 = arith.constant 0 : i32
    return %c0_i32, %c0_i32_0 : i32, i32
  }
  func.func @transform_5(%arg0: i32, %arg1: i32) -> (i32, i32) {
    %c0_i32 = arith.constant 0 : i32
    %c0_i32_0 = arith.constant 0 : i32
    return %arg0, %c0_i32 : i32, i32
  }
}

module attributes {stable_mosaic.version = 11 : i64} {
  func.func @mlp_kernel(%arg0: i32, %arg1: i32, %arg2: memref<128x128xf32, #tpu.memory_space<vmem>>, %arg3: memref<128x128xf32, #tpu.memory_space<vmem>>, %arg4: memref<1x128xf32, #tpu.memory_space<vmem>>, %arg5: memref<128x128xf32, #tpu.memory_space<vmem>>, %arg6: memref<1x128xf32, #tpu.memory_space<vmem>>, %arg7: memref<128x128xf32, #tpu.memory_space<vmem>>, %arg8: memref<128x128xf32, #tpu.memory_space<vmem>>) attributes {dimension_semantics = [#tpu.dimension_semantics<parallel>, #tpu.dimension_semantics<arbitrary>], iteration_bounds = array<i64: 2, 1>, scalar_prefetch = 0 : i64, scratch_operands = 1 : i64, tpu.core_type = #tpu.core_type<tc>, window_params = [{transform_indices = @transform_0, window_bounds = array<i64: 128, 128>}, {transform_indices = @transform_1, window_bounds = array<i64: 128, 128>}, {transform_indices = @transform_2, window_bounds = array<i64: 1, 128>}, {transform_indices = @transform_3, window_bounds = array<i64: 128, 128>}, {pipeline_mode = #tpu.pipeline_mode<synchronous>, transform_indices = @transform_4, window_bounds = array<i64: 1, 128>}, {transform_indices = @transform_5, window_bounds = array<i64: 128, 128>}]} {
    %c0_i32 = arith.constant 0 : i32
    %0 = arith.cmpi eq, %arg1, %c0_i32 : i32
    %1 = arith.extui %0 : i1 to i32
    %c0_i32_0 = arith.constant 0 : i32
    %2 = arith.cmpi ne, %1, %c0_i32_0 : i32
    scf.if %2 {
      %cst_17 = arith.constant 0.000000e+00 : f32
      %22 = vector.broadcast %cst_17 : f32 to vector<128x128xf32>
      %c0_18 = arith.constant 0 : index
      %c0_19 = arith.constant 0 : index
      %23 = vector.load %arg8[%c0_18, %c0_19] : memref<128x128xf32, #tpu.memory_space<vmem>>, vector<128x128xf32>
      tpu.vector_store %arg8[%c0_18, %c0_19], %22 {strides = array<i32>} : memref<128x128xf32, #tpu.memory_space<vmem>>, vector<128x128xf32>,
    } else {
    }
    %c0 = arith.constant 0 : index
    %c0_1 = arith.constant 0 : index
    %3 = vector.load %arg2[%c0, %c0_1] : memref<128x128xf32, #tpu.memory_space<vmem>>, vector<128x128xf32>
    %c0_2 = arith.constant 0 : index
    %c0_3 = arith.constant 0 : index
    %4 = vector.load %arg3[%c0_2, %c0_3] : memref<128x128xf32, #tpu.memory_space<vmem>>, vector<128x128xf32>
    %c0_4 = arith.constant 0 : index
    %c0_5 = arith.constant 0 : index
    %5 = vector.load %arg5[%c0_4, %c0_5] : memref<128x128xf32, #tpu.memory_space<vmem>>, vector<128x128xf32>
    %cst = arith.constant dense<0.000000e+00> : vector<128x128xf32>
    %6 = tpu.matmul %3, %4, %cst {dimension_numbers = #tpu.dot_dimension_numbers<[1], [0], [0], [1], [0, 0, 1, 1], [], []>} : vector<128x128xf32>, vector<128x128xf32>, vector<128x128xf32> -> vector<128x128xf32>
    %c0_6 = arith.constant 0 : index
    %c0_7 = arith.constant 0 : index
    %7 = vector.load %arg4[%c0_6, %c0_7] : memref<1x128xf32, #tpu.memory_space<vmem>>, vector<1x128xf32>
    %8 = vector.broadcast %7 : vector<1x128xf32> to vector<128x128xf32>
    %9 = arith.addf %6, %8 : vector<128x128xf32>
    %cst_8 = arith.constant 0.000000e+00 : f32
    %10 = vector.broadcast %cst_8 : f32 to vector<128x128xf32>
    %11 = arith.cmpf ogt, %9, %10 : vector<128x128xf32>
    %cst_9 = arith.constant 0.00999999977 : f32
    %12 = vector.broadcast %cst_9 : f32 to vector<128x128xf32>
    %13 = arith.mulf %12, %9 : vector<128x128xf32>
    %14 = arith.select %11, %9, %13 : vector<128x128xi1>, vector<128x128xf32>
    %c0_10 = arith.constant 0 : index
    %c0_11 = arith.constant 0 : index
    %15 = vector.load %arg8[%c0_10, %c0_11] : memref<128x128xf32, #tpu.memory_space<vmem>>, vector<128x128xf32>
    %cst_12 = arith.constant dense<0.000000e+00> : vector<128x128xf32>
    %16 = tpu.matmul %14, %5, %cst_12 {dimension_numbers = #tpu.dot_dimension_numbers<[1], [0], [0], [1], [0, 0, 1, 1], [], []>} : vector<128x128xf32>, vector<128x128xf32>, vector<128x128xf32> -> vector<128x128xf32>
    %17 = arith.addf %15, %16 : vector<128x128xf32>
    %c0_13 = arith.constant 0 : index
    %c0_14 = arith.constant 0 : index
    %18 = vector.load %arg8[%c0_13, %c0_14] : memref<128x128xf32, #tpu.memory_space<vmem>>, vector<128x128xf32>
    tpu.vector_store %arg8[%c0_13, %c0_14], %17 {strides = array<i32>} : memref<128x128xf32, #tpu.memory_space<vmem>>, vector<128x128xf32>,
    %c0_i32_15 = arith.constant 0 : i32
    %19 = arith.cmpi eq, %arg1, %c0_i32_15 : i32
    %20 = arith.extui %19 : i1 to i32
    %c0_i32_16 = arith.constant 0 : i32
    %21 = arith.cmpi ne, %20, %c0_i32_16 : i32
    scf.if %21 {
      %c0_17 = arith.constant 0 : index
      %c0_18 = arith.constant 0 : index
      %22 = vector.load %arg8[%c0_17, %c0_18] : memref<128x128xf32, #tpu.memory_space<vmem>>, vector<128x128xf32>
      %c0_19 = arith.constant 0 : index
      %c0_20 = arith.constant 0 : index
      %23 = vector.load %arg6[%c0_19, %c0_20] : memref<1x128xf32, #tpu.memory_space<vmem>>, vector<1x128xf32>
      %24 = vector.broadcast %23 : vector<1x128xf32> to vector<128x128xf32>
      %25 = arith.addf %22, %24 : vector<128x128xf32>
      %cst_21 = arith.constant 0.000000e+00 : f32
      %26 = vector.broadcast %cst_21 : f32 to vector<128x128xf32>
      %27 = arith.cmpf ogt, %25, %26 : vector<128x128xf32>
      %cst_22 = arith.constant 0.00999999977 : f32
      %28 = vector.broadcast %cst_22 : f32 to vector<128x128xf32>
      %29 = arith.mulf %28, %25 : vector<128x128xf32>
      %30 = arith.select %27, %25, %29 : vector<128x128xi1>, vector<128x128xf32>
      %c0_23 = arith.constant 0 : index
      %c0_24 = arith.constant 0 : index
      %31 = vector.load %arg7[%c0_23, %c0_24] : memref<128x128xf32, #tpu.memory_space<vmem>>, vector<128x128xf32>
      tpu.vector_store %arg7[%c0_23, %c0_24], %30 {strides = array<i32>} : memref<128x128xf32, #tpu.memory_space<vmem>>, vector<128x128xf32>,
    } else {
    }
    return
  }
  func.func @transform_0(%arg0: i32, %arg1: i32) -> (i32, i32) {
    %c0_i32 = arith.constant 0 : i32
    %c0_i32_0 = arith.constant 0 : i32
    return %arg0, %c0_i32 : i32, i32
  }
  func.func @transform_1(%arg0: i32, %arg1: i32) -> (i32, i32) {
    %c0_i32 = arith.constant 0 : i32
    %c0_i32_0 = arith.constant 0 : i32
    return %c0_i32, %arg1 : i32, i32
  }
  func.func @transform_2(%arg0: i32, %arg1: i32) -> (i32, i32) {
    %c0_i32 = arith.constant 0 : i32
    %c0_i32_0 = arith.constant 0 : i32
    return %c0_i32, %arg1 : i32, i32
  }
  func.func @transform_3(%arg0: i32, %arg1: i32) -> (i32, i32) {
    %c0_i32 = arith.constant 0 : i32
    %c0_i32_0 = arith.constant 0 : i32
    return %arg1, %c0_i32 : i32, i32
  }
  func.func @transform_4(%arg0: i32, %arg1: i32) -> (i32, i32) {
    %c0_i32 = arith.constant 0 : i32
    %c0_i32_0 = arith.constant 0 : i32
    %c0_i32_1 = arith.constant 0 : i32
    return %c0_i32, %c0_i32_0 : i32, i32
  }
  func.func @transform_5(%arg0: i32, %arg1: i32) -> (i32, i32) {
    %c0_i32 = arith.constant 0 : i32
    %c0_i32_0 = arith.constant 0 : i32
    return %arg0, %c0_i32 : i32, i32
  }
}

</mosaic_0001>

<llo_original>
// kernel: tpu_custom_call.1
$region0: #{tpu_custom_call.1}
  #allocation0 [shape = 'u32[]', space=smem, size = 0x4, offset = 0x4, fixed_abs, tag = 'smem constant byte address 0x4 - core index']
  #allocation1 [shape = 'u32[72,128]{1,0:T(1,128)}', space=vmem, size = 0x9000, scoped, tag = 'internal scratch']
  #allocation2 [shape = 'f32[128,128]{1,0:T(8,128)}', space=vmem, size = 0x10000, scoped, tag = 'scratch operand']
  %s0 = inlined_call_operand.hbm [shape: f32[256,128], index: 0, kind: input, shape index: {}]
  %s1 = inlined_call_operand.hbm [shape: f32[128,128], index: 1, kind: input, shape index: {}]
  %s2 = inlined_call_operand.vmem [shape: f32[1,128], index: 2, kind: input, shape index: {}]
  %s3 = inlined_call_operand.hbm [shape: f32[128,128], index: 3, kind: input, shape index: {}]
  %s4 = inlined_call_operand.vmem [shape: f32[1,128], index: 4, kind: input, shape index: {}]
  %s5 = inlined_call_operand.hbm [shape: f32[256,128], index: 5, kind: output, shape index: {}]
  %s6 = sld [smem:[#allocation0]]
  $region73: #{tpu_custom_call.1} parent=0
    _
  %s8 = ssub.s32 1, %s6
  %s9 = scalar_select 0, %s8, %s6
  $region1: #{tpu_custom_call.1} parent=0
    #allocation3 [shape = 'u8[131072]{0}', space=vmem, size = 0x20000, scoped, tag = 'input window, operand 0']
    #allocation4 [shape = 's32[2]{0}', space=sflag, size = 0x8, scoped, tag = 'scoped memory for tpu_custom_call.1']
    #allocation5 [shape = 's32[2]{0}', space=sflag, size = 0x8, scoped, tag = 'scoped memory for tpu_custom_call.1']
    #allocation6 [shape = 'u8[65536]{0}', space=vmem, size = 0x10000, scoped, tag = 'input window, operand 1, single buffered']
    #allocation7 [shape = 's32[1]{0}', space=sflag, size = 0x4, scoped, tag = 'scoped memory for tpu_custom_call.1']
    #allocation8 [shape = 'u8[65536]{0}', space=vmem, size = 0x10000, scoped, tag = 'input window, operand 3, single buffered']
    #allocation9 [shape = 'u8[131072]{0}', space=vmem, size = 0x20000, scoped, tag = 'output window, operand 0']
    %10 = vsyncpa [#allocation4], 0
    %s11 = scalar_lea.sflag [#allocation4], 1
    %12 = vsyncpa %s11, 0
    %13 = vsyncpa [#allocation7], 0
    %14 = vsyncpa [#allocation5], 0
    %s15 = scalar_lea.sflag [#allocation5], 1
    %16 = vsyncpa %s15, 0
    loop: start=0, step=1, limit=4
    $region2: #{tpu_custom_call.1} parent=1 // loop_pre_header
      _
    $region3: #{tpu_custom_call.1} parent=1 // loop_header
      %s18 = sphi 0, %s22
      %p19 = scmp.ge.s32.totalorder %s18, 4
      %s25 = sphi 0, %s37
      %s26 = sphi 0, %s33
      %s27 = sphi 0, %s25
      %s28 = sphi 0, %s26
      %s29 = sphi 0, %s27
      %s30 = sphi 0, %s28
      %s40 = sphi 0, %s42
      %s43 = sphi 0, %s40
      %s44 = sphi 0, %s43
      %s60 = sphi 0, %s44
      %s66 = sphi 0, %s68
      %s69 = sphi 0, %s66
      %s70 = sphi 0, %s69
      %s86 = sphi 0, %s70
      %s92 = sphi 0, %s94
      %s95 = sphi 0, %s92
      %s96 = sphi 0, %s95
      %s112 = sphi 0, %s96
      %s118 = sphi 0, %s120
      %s121 = sphi 0, %s118
      %s122 = sphi 0, %s121
      %s138 = sphi 0, %s122
      %s142 = sphi 0, %s142
      %s144 = sphi 0, %s142
      %s145 = sphi 0, %s144
      %s159 = sphi 0, %s145
      %s165 = sphi 0, %s167
      %s168 = sphi 0, %s165
      %s169 = sphi 0, %s168
      %s185 = sphi 0, %s169
    $region4: #{tpu_custom_call.1} parent=1 // loop_header_branch
      %21 = sbr.rel (%p19) target = $region8
    $region5: #{tpu_custom_call.1} parent=1 // loop_body
      %s23 = ssub.s32 %s18, 1
      %s24 = ssub.s32 %s18, 2
      %s31 = sadd.s32 1, %s26
      %p32 = scmp.ge.s32.totalorder %s31, 1
      %s33 = scalar_select %p32, 0, %s31
      %s34 = sadd.s32 1, %s25
      %s35 = scalar_select %p32, %s34, %s25
      %p36 = scmp.ge.s32.totalorder %s35, 2
      %s37 = scalar_select %p36, 0, %s35
      %s38 = ssub.s32 %s25, %s37
      %p39 = scmp.eq.s32.totalorder %s38, 0
      %s41 = sadd.s32 %s40, 1
      %s42 = scalar_select %p39, %s40, %s41
      %p45 = pneg %p39
      %p46 = scmp.eq.s32.totalorder %s18, 1
      %p47 = por %p45, %p46
      %p48 = scmp.ne.s32.totalorder %s40, %s43
      %p49 = scmp.eq.s32.totalorder %s18, 0
      %p50 = por %p48, %p49
      %p51 = scmp.ne.s32.totalorder %s40, %s43
      %p52 = scmp.eq.s32.totalorder %s23, 1
      %p53 = por %p51, %p52
      %p54 = scmp.ne.s32.totalorder %s43, %s44
      %p55 = scmp.eq.s32.totalorder %s23, 0
      %p56 = por %p54, %p55
      %p57 = scmp.ne.s32.totalorder %s43, %s44
      %p58 = scmp.eq.s32.totalorder %s24, 1
      %p59 = por %p57, %p58
      %p61 = scmp.ne.s32.totalorder %s44, %s60
      %p62 = scmp.eq.s32.totalorder %s24, 0
      %p63 = por %p61, %p62
      %s64 = ssub.s32 %s26, %s33
      %p65 = scmp.eq.s32.totalorder %s64, 0
      %s67 = sadd.s32 %s66, 1
      %s68 = scalar_select %p65, %s66, %s67
      %p71 = pneg %p65
      %p72 = scmp.eq.s32.totalorder %s18, 1
      %p73 = por %p71, %p72
      %p74 = scmp.ne.s32.totalorder %s66, %s69
      %p75 = scmp.eq.s32.totalorder %s18, 0
      %p76 = por %p74, %p75
      %p77 = scmp.ne.s32.totalorder %s66, %s69
      %p78 = scmp.eq.s32.totalorder %s23, 1
      %p79 = por %p77, %p78
      %p80 = scmp.ne.s32.totalorder %s69, %s70
      %p81 = scmp.eq.s32.totalorder %s23, 0
      %p82 = por %p80, %p81
      %p83 = scmp.ne.s32.totalorder %s69, %s70
      %p84 = scmp.eq.s32.totalorder %s24, 1
      %p85 = por %p83, %p84
      %p87 = scmp.ne.s32.totalorder %s70, %s86
      %p88 = scmp.eq.s32.totalorder %s24, 0
      %p89 = por %p87, %p88
      %s90 = ssub.s32 %s26, %s33
      %p91 = scmp.eq.s32.totalorder %s90, 0
      %s93 = sadd.s32 %s92, 1
      %s94 = scalar_select %p91, %s92, %s93
      %p97 = pneg %p91
      %p98 = scmp.eq.s32.totalorder %s18, 1
      %p99 = por %p97, %p98
      %p100 = scmp.ne.s32.totalorder %s92, %s95
      %p101 = scmp.eq.s32.totalorder %s18, 0
      %p102 = por %p100, %p101
      %p103 = scmp.ne.s32.totalorder %s92, %s95
      %p104 = scmp.eq.s32.totalorder %s23, 1
      %p105 = por %p103, %p104
      %p106 = scmp.ne.s32.totalorder %s95, %s96
      %p107 = scmp.eq.s32.totalorder %s23, 0
      %p108 = por %p106, %p107
      %p109 = scmp.ne.s32.totalorder %s95, %s96
      %p110 = scmp.eq.s32.totalorder %s24, 1
      %p111 = por %p109, %p110
      %p113 = scmp.ne.s32.totalorder %s96, %s112
      %p114 = scmp.eq.s32.totalorder %s24, 0
      %p115 = por %p113, %p114
      %s116 = ssub.s32 %s26, %s33
      %p117 = scmp.eq.s32.totalorder %s116, 0
      %s119 = sadd.s32 %s118, 1
      %s120 = scalar_select %p117, %s118, %s119
      %p123 = pneg %p117
      %p124 = scmp.eq.s32.totalorder %s18, 1
      %p125 = por %p123, %p124
      %p126 = scmp.ne.s32.totalorder %s118, %s121
      %p127 = scmp.eq.s32.totalorder %s18, 0
      %p128 = por %p126, %p127
      %p129 = scmp.ne.s32.totalorder %s118, %s121
      %p130 = scmp.eq.s32.totalorder %s23, 1
      %p131 = por %p129, %p130
      %p132 = scmp.ne.s32.totalorder %s121, %s122
      %p133 = scmp.eq.s32.totalorder %s23, 0
      %p134 = por %p132, %p133
      %p135 = scmp.ne.s32.totalorder %s121, %s122
      %p136 = scmp.eq.s32.totalorder %s24, 1
      %p137 = por %p135, %p136
      %p139 = scmp.ne.s32.totalorder %s122, %s138
      %p140 = scmp.eq.s32.totalorder %s24, 0
      %p141 = por %p139, %p140
      %s143 = sadd.s32 %s142, 1
      %p146 = scmp.eq.s32.totalorder %s18, 1
      %p147 = scmp.ne.s32.totalorder %s142, %s144
      %p148 = scmp.eq.s32.totalorder %s18, 0
      %p149 = por %p147, %p148
      %p150 = scmp.ne.s32.totalorder %s142, %s144
      %p151 = scmp.eq.s32.totalorder %s23, 1
      %p152 = por %p150, %p151
      %p153 = scmp.ne.s32.totalorder %s144, %s145
      %p154 = scmp.eq.s32.totalorder %s23, 0
      %p155 = por %p153, %p154
      %p156 = scmp.ne.s32.totalorder %s144, %s145
      %p157 = scmp.eq.s32.totalorder %s24, 1
      %p158 = por %p156, %p157
      %p160 = scmp.ne.s32.totalorder %s145, %s159
      %p161 = scmp.eq.s32.totalorder %s24, 0
      %p162 = por %p160, %p161
      %s163 = ssub.s32 %s25, %s37
      %p164 = scmp.eq.s32.totalorder %s163, 0
      %s166 = sadd.s32 %s165, 1
      %s167 = scalar_select %p164, %s165, %s166
      %p170 = pneg %p164
      %p171 = scmp.eq.s32.totalorder %s18, 1
      %p172 = por %p170, %p171
      %p173 = scmp.ne.s32.totalorder %s165, %s168
      %p174 = scmp.eq.s32.totalorder %s18, 0
      %p175 = por %p173, %p174
      %p176 = scmp.ne.s32.totalorder %s165, %s168
      %p177 = scmp.eq.s32.totalorder %s23, 1
      %p178 = por %p176, %p177
      %p179 = scmp.ne.s32.totalorder %s168, %s169
      %p180 = scmp.eq.s32.totalorder %s23, 0
      %p181 = por %p179, %p180
      %p182 = scmp.ne.s32.totalorder %s168, %s169
      %p183 = scmp.eq.s32.totalorder %s24, 1
      %p184 = por %p182, %p183
      %p186 = scmp.ne.s32.totalorder %s169, %s185
      %p187 = scmp.eq.s32.totalorder %s24, 0
      %p188 = por %p186, %p187
      %p189 = scmp.le.s32.totalorder 1, %s18
      %p190 = scmp.lt.s32.totalorder %s18, 3
      %p191 = pnand %p189, %p190
      %p192 = pneg %p191
      // Predicated region
      $region9: #{tpu_custom_call.1} parent=5 // pred_check
        _
      $region10: #{tpu_custom_call.1} parent=5 // pred_check_branch
        %194 = sbr.rel (%p191) target = $region12
      $region11: #{tpu_custom_call.1} parent=5 // pred_region
        %s195 = ssub.s32 %s18, 1
        // Predicated region
        $region13: #{tpu_custom_call.1} parent=11 // pred_check
          %p196 = pneg %p82
        $region14: #{tpu_custom_call.1} parent=11 // pred_check_branch
          %198 = sbr.rel (%p196) target = $region16
        $region15: #{tpu_custom_call.1} parent=11 // pred_region
          %200 = vsyncadd [#allocation7], 0
          %s201 = smul.addr %s28, 8
          %s202 = scalar_lea.hbm %s1, %s201
          %s203 = sshll.u32 %s202, 4
          %s204 = int_to_ptr.hbm [resolvable:$true] %s203
          %s205 = sshll.u32 [#allocation6], 4
          %s206 = int_to_ptr.vmem [resolvable:$true] %s205
          %211 = dma.hbm_to_vmem [thread:$0]  %s204, 2048, %s206, [#allocation7], 128, 128, 8
        $region16: #{tpu_custom_call.1} parent=11 // pred_fallthru
          _
        // Predicated region
        $region17: #{tpu_custom_call.1} parent=11 // pred_check
          %p212 = pneg %p108
        $region18: #{tpu_custom_call.1} parent=11 // pred_check_branch
          %214 = sbr.rel (%p212) target = $region20
        $region19: #{tpu_custom_call.1} parent=11 // pred_region
          %p215 = scmp.lt.s32.totalorder %s28, 0
          %s216 = scalar_select %p215, %s28, 0
          %s217 = scalar_lea.vmem %s2, %s216
        $region20: #{tpu_custom_call.1} parent=11 // pred_fallthru
          _
        // Predicated region
        $region21: #{tpu_custom_call.1} parent=11 // pred_check
          %p218 = pneg %p134
        $region22: #{tpu_custom_call.1} parent=11 // pred_check_branch
          %220 = sbr.rel (%p218) target = $region24
        $region23: #{tpu_custom_call.1} parent=11 // pred_region
          %s221 = smul.u32 16, %s28
          %223 = vsyncadd [#allocation7], 0
          %s224 = smul.addr %s221, 8
          %s225 = scalar_lea.hbm %s3, %s224
          %s226 = sshll.u32 %s225, 4
          %s227 = int_to_ptr.hbm [resolvable:$true] %s226
          %s228 = sshll.u32 [#allocation8], 4
          %s229 = int_to_ptr.vmem [resolvable:$true] %s228
          %234 = dma.hbm_to_vmem [thread:$0]  %s227, 2048, %s229, [#allocation7], 128, 128, 8
        $region24: #{tpu_custom_call.1} parent=11 // pred_fallthru
          _
        // Predicated region
        $region25: #{tpu_custom_call.1} parent=11 // pred_check
          %p235 = pneg %p155
        $region26: #{tpu_custom_call.1} parent=11 // pred_check_branch
          %237 = sbr.rel (%p235) target = $region28
        $region27: #{tpu_custom_call.1} parent=11 // pred_region
          _
        $region28: #{tpu_custom_call.1} parent=11 // pred_fallthru
          _
      $region12: #{tpu_custom_call.1} parent=5 // pred_fallthru
        _
      %p238 = scmp.lt.s32.totalorder %s18, 2
      // Predicated region
      $region29: #{tpu_custom_call.1} parent=5 // pred_check
        %p239 = pneg %p238
      $region30: #{tpu_custom_call.1} parent=5 // pred_check_branch
        %241 = sbr.rel (%p239) target = $region32
      $region31: #{tpu_custom_call.1} parent=5 // pred_region
        // Predicated region
        $region33: #{tpu_custom_call.1} parent=31 // pred_check
          %p242 = pneg %p50
        $region34: #{tpu_custom_call.1} parent=31 // pred_check_branch
          %244 = sbr.rel (%p242) target = $region36
        $region35: #{tpu_custom_call.1} parent=31 // pred_region
          %s245 = sand.u32 %s40, 1
          %s246 = scalar_lea.sflag [#allocation4], %s245
          %s247 = sand.u32 %s40, 1
          %s248 = smul.addr %s247, 128
          %s249 = scalar_lea.vmem [#allocation3], %s248
          %s250 = smul.u32 16, %s25
          %252 = vsyncadd %s246, 0
          %s253 = smul.addr %s250, 8
          %s254 = scalar_lea.hbm %s0, %s253
          %s255 = sshll.u32 %s254, 4
          %s256 = int_to_ptr.hbm [resolvable:$true] %s255
          %s257 = sshll.u32 %s249, 4
          %s258 = int_to_ptr.vmem [resolvable:$true] %s257
          %263 = dma.hbm_to_vmem [thread:$0]  %s256, 2048, %s258, %s246, 128, 128, 8
        $region36: #{tpu_custom_call.1} parent=31 // pred_fallthru
          _
      $region32: #{tpu_custom_call.1} parent=5 // pred_fallthru
        _
      %p264 = scmp.le.s32.totalorder 1, %s18
      %p265 = scmp.lt.s32.totalorder %s18, 3
      %p266 = pnand %p264, %p265
      %p267 = pneg %p266
      // Predicated region
      $region37: #{tpu_custom_call.1} parent=5 // pred_check
        _
      $region38: #{tpu_custom_call.1} parent=5 // pred_check_branch
        %269 = sbr.rel (%p266) target = $region40
      $region39: #{tpu_custom_call.1} parent=5 // pred_region
        %s270 = ssub.s32 %s18, 1
        %s271 = sand.u32 %s43, 1
        %s272 = scalar_lea.sflag [#allocation4], %s271
        %s273 = sand.u32 %s43, 1
        %s274 = smul.addr %s273, 128
        %s275 = scalar_lea.vmem [#allocation3], %s274
        // Predicated region
        $region41: #{tpu_custom_call.1} parent=39 // pred_check
          %p276 = pneg %p56
        $region42: #{tpu_custom_call.1} parent=39 // pred_check_branch
          %278 = sbr.rel (%p276) target = $region44
        $region43: #{tpu_custom_call.1} parent=39 // pred_region
          %280 = dma.done %s272, 2048
        $region44: #{tpu_custom_call.1} parent=39 // pred_fallthru
          _
        // Predicated region
        $region45: #{tpu_custom_call.1} parent=39 // pred_check
          %p281 = pneg %p82
        $region46: #{tpu_custom_call.1} parent=39 // pred_check_branch
          %283 = sbr.rel (%p281) target = $region48
        $region47: #{tpu_custom_call.1} parent=39 // pred_region
          %285 = dma.done [#allocation7], 2048
        $region48: #{tpu_custom_call.1} parent=39 // pred_fallthru
          _
        // Predicated region
        $region49: #{tpu_custom_call.1} parent=39 // pred_check
          %p286 = pneg %p134
        $region50: #{tpu_custom_call.1} parent=39 // pred_check_branch
          %288 = sbr.rel (%p286) target = $region52
        $region51: #{tpu_custom_call.1} parent=39 // pred_region
          %290 = dma.done [#allocation7], 2048
        $region52: #{tpu_custom_call.1} parent=39 // pred_fallthru
          _
        %s291 = sand.u32 %s43, 1
        %s292 = scalar_lea.sflag [#allocation4], %s291
        %s293 = sand.u32 %s43, 1
        %s294 = smul.addr %s293, 128
        %s295 = scalar_lea.vmem [#allocation3], %s294
        %p296 = pneg %p56
        %p297 = pneg %p53
        %p298 = pneg %p82
        %p299 = pneg %p79
        %p300 = scmp.lt.s32.totalorder %s28, 0
        %s301 = scalar_select %p300, %s28, 0
        %s302 = scalar_lea.vmem %s2, %s301
        %p303 = pneg %p108
        %p304 = pneg %p105
        %p305 = pneg %p134
        %p306 = pneg %p131
        %p307 = pneg %p155
        %p308 = pneg %p152
        %p309 = pneg %p181
        %p310 = pneg %p178
        %s311 = sand.u32 %s168, 1
        %s312 = scalar_lea.sflag [#allocation5], %s311
        %s313 = sand.u32 %s168, 1
        %s314 = smul.addr %s313, 128
        %s315 = scalar_lea.vmem [#allocation9], %s314
        %s316 = smul.u32 16, %s27
        %p317 = scmp.lt.s32.totalorder %s28, 0
        %s318 = scalar_select %p317, %s28, 0
        %s319 = scalar_lea.vmem %s2, %s318
        %s320 = smul.u32 16, %s28
        %s321 = smul.u32 16, %s27
        %p322 = scmp.eq.s32.totalorder %s28, 0
        // Predicated region
        $region53: #{tpu_custom_call.1} parent=39 // pred_check
          %p323 = pneg %p322
        $region54: #{tpu_custom_call.1} parent=39 // pred_check_branch
          %325 = sbr.rel (%p323) target = $region56
        $region55: #{tpu_custom_call.1} parent=39 // pred_region
          %326 = vst [vmem:[#allocation2] sm:$0xff] 0.0
          %327 = vst [vmem:[#allocation2 + $0x8] sm:$0xff] 0.0
          %328 = vst [vmem:[#allocation2 + $0x10] sm:$0xff] 0.0
          %329 = vst [vmem:[#allocation2 + $0x18] sm:$0xff] 0.0
          %330 = vst [vmem:[#allocation2 + $0x20] sm:$0xff] 0.0
          %331 = vst [vmem:[#allocation2 + $0x28] sm:$0xff] 0.0
          %332 = vst [vmem:[#allocation2 + $0x30] sm:$0xff] 0.0
          %333 = vst [vmem:[#allocation2 + $0x38] sm:$0xff] 0.0
          %334 = vst [vmem:[#allocation2 + $0x40] sm:$0xff] 0.0
          %335 = vst [vmem:[#allocation2 + $0x48] sm:$0xff] 0.0
          %336 = vst [vmem:[#allocation2 + $0x50] sm:$0xff] 0.0
          %337 = vst [vmem:[#allocation2 + $0x58] sm:$0xff] 0.0
          %338 = vst [vmem:[#allocation2 + $0x60] sm:$0xff] 0.0
          %339 = vst [vmem:[#allocation2 + $0x68] sm:$0xff] 0.0
          %340 = vst [vmem:[#allocation2 + $0x70] sm:$0xff] 0.0
          %341 = vst [vmem:[#allocation2 + $0x78] sm:$0xff] 0.0
        $region56: #{tpu_custom_call.1} parent=39 // pred_fallthru
          _
        %v342 = vld [vmem:[%s275] sm:$0xff]
        %v343 = vld [vmem:[%s275 + $0x8] sm:$0xff]
        %v344 = vld [vmem:[%s275 + $0x10] sm:$0xff]
        %v345 = vld [vmem:[%s275 + $0x18] sm:$0xff]
        %v346 = vld [vmem:[%s275 + $0x20] sm:$0xff]
        %v347 = vld [vmem:[%s275 + $0x28] sm:$0xff]
        %v348 = vld [vmem:[%s275 + $0x30] sm:$0xff]
        %v349 = vld [vmem:[%s275 + $0x38] sm:$0xff]
        %v350 = vld [vmem:[%s275 + $0x40] sm:$0xff]
        %v351 = vld [vmem:[%s275 + $0x48] sm:$0xff]
        %v352 = vld [vmem:[%s275 + $0x50] sm:$0xff]
        %v353 = vld [vmem:[%s275 + $0x58] sm:$0xff]
        %v354 = vld [vmem:[%s275 + $0x60] sm:$0xff]
        %v355 = vld [vmem:[%s275 + $0x68] sm:$0xff]
        %v356 = vld [vmem:[%s275 + $0x70] sm:$0xff]
        %v357 = vld [vmem:[%s275 + $0x78] sm:$0xff]
        %v358 = vld [vmem:[#allocation6] sm:$0xff]
        %v359 = vld [vmem:[#allocation6 + $0x8] sm:$0xff]
        %v360 = vld [vmem:[#allocation6 + $0x10] sm:$0xff]
        %v361 = vld [vmem:[#allocation6 + $0x18] sm:$0xff]
        %v362 = vld [vmem:[#allocation6 + $0x20] sm:$0xff]
        %v363 = vld [vmem:[#allocation6 + $0x28] sm:$0xff]
        %v364 = vld [vmem:[#allocation6 + $0x30] sm:$0xff]
        %v365 = vld [vmem:[#allocation6 + $0x38] sm:$0xff]
        %v366 = vld [vmem:[#allocation6 + $0x40] sm:$0xff]
        %v367 = vld [vmem:[#allocation6 + $0x48] sm:$0xff]
        %v368 = vld [vmem:[#allocation6 + $0x50] sm:$0xff]
        %v369 = vld [vmem:[#allocation6 + $0x58] sm:$0xff]
        %v370 = vld [vmem:[#allocation6 + $0x60] sm:$0xff]
        %v371 = vld [vmem:[#allocation6 + $0x68] sm:$0xff]
        %v372 = vld [vmem:[#allocation6 + $0x70] sm:$0xff]
        %v373 = vld [vmem:[#allocation6 + $0x78] sm:$0xff]
        %v374 = vld [vmem:[#allocation8] sm:$0xff]
        %v375 = vld [vmem:[#allocation8 + $0x8] sm:$0xff]
        %v376 = vld [vmem:[#allocation8 + $0x10] sm:$0xff]
        %v377 = vld [vmem:[#allocation8 + $0x18] sm:$0xff]
        %v378 = vld [vmem:[#allocation8 + $0x20] sm:$0xff]
        %v379 = vld [vmem:[#allocation8 + $0x28] sm:$0xff]
        %v380 = vld [vmem:[#allocation8 + $0x30] sm:$0xff]
        %v381 = vld [vmem:[#allocation8 + $0x38] sm:$0xff]
        %v382 = vld [vmem:[#allocation8 + $0x40] sm:$0xff]
        %v383 = vld [vmem:[#allocation8 + $0x48] sm:$0xff]
        %v384 = vld [vmem:[#allocation8 + $0x50] sm:$0xff]
        %v385 = vld [vmem:[#allocation8 + $0x58] sm:$0xff]
        %v386 = vld [vmem:[#allocation8 + $0x60] sm:$0xff]
        %v387 = vld [vmem:[#allocation8 + $0x68] sm:$0xff]
        %v388 = vld [vmem:[#allocation8 + $0x70] sm:$0xff]
        %v389 = vld [vmem:[#allocation8 + $0x78] sm:$0xff]
        %v390 = vld [vmem:[%s319] sm:$0x1]
        %v392 = vperm.slane %v390, 0
        %394 = vmatpush.msra.mxu0 %v373
        %395 = vmatpush.msra.mxu0 %v372
        %396 = vmatpush.msra.mxu0 %v371
        %397 = vmatpush.msra.mxu0 %v370
        %398 = vmatpush.msra.mxu0 %v369
        %399 = vmatpush.msra.mxu0 %v368
        %400 = vmatpush.msra.mxu0 %v367
        %401 = vmatpush.msra.mxu0 %v366
        %402 = vmatpush.msra.mxu0 %v365
        %403 = vmatpush.msra.mxu0 %v364
        %404 = vmatpush.msra.mxu0 %v363
        %405 = vmatpush.msra.mxu0 %v362
        %406 = vmatpush.msra.mxu0 %v361
        %407 = vmatpush.msra.mxu0 %v360
        %408 = vmatpush.msra.mxu0 %v359
        %409 = vmatpush.msra.mxu0 %v358
        %410 = vmatmul.f32.gmra.mxu0 %v342
        %v411 = vpop.f32.mrf.mxu0
        %v412 = vadd.f32 %v392, %v411
        %413 = vmatmul.f32.gmra.mxu0 %v343
        %v414 = vpop.f32.mrf.mxu0
        %v415 = vadd.f32 %v392, %v414
        %416 = vmatmul.f32.gmra.mxu0 %v344
        %v417 = vpop.f32.mrf.mxu0
        %v418 = vadd.f32 %v392, %v417
        %419 = vmatmul.f32.gmra.mxu0 %v345
        %v420 = vpop.f32.mrf.mxu0
        %v421 = vadd.f32 %v392, %v420
        %422 = vmatmul.f32.gmra.mxu0 %v346
        %v423 = vpop.f32.mrf.mxu0
        %v424 = vadd.f32 %v392, %v423
        %425 = vmatmul.f32.gmra.mxu0 %v347
        %v426 = vpop.f32.mrf.mxu0
        %v427 = vadd.f32 %v392, %v426
        %428 = vmatmul.f32.gmra.mxu0 %v348
        %v429 = vpop.f32.mrf.mxu0
        %v430 = vadd.f32 %v392, %v429
        %431 = vmatmul.f32.gmra.mxu0 %v349
        %v432 = vpop.f32.mrf.mxu0
        %v433 = vadd.f32 %v392, %v432
        %434 = vmatmul.f32.gmra.mxu0 %v350
        %v435 = vpop.f32.mrf.mxu0
        %v436 = vadd.f32 %v392, %v435
        %437 = vmatmul.f32.gmra.mxu0 %v351
        %v438 = vpop.f32.mrf.mxu0
        %v439 = vadd.f32 %v392, %v438
        %440 = vmatmul.f32.gmra.mxu0 %v352
        %v441 = vpop.f32.mrf.mxu0
        %v442 = vadd.f32 %v392, %v441
        %443 = vmatmul.f32.gmra.mxu0 %v353
        %v444 = vpop.f32.mrf.mxu0
        %v445 = vadd.f32 %v392, %v444
        %446 = vmatmul.f32.gmra.mxu0 %v354
        %v447 = vpop.f32.mrf.mxu0
        %v448 = vadd.f32 %v392, %v447
        %449 = vmatmul.f32.gmra.mxu0 %v355
        %v450 = vpop.f32.mrf.mxu0
        %v451 = vadd.f32 %v392, %v450
        %452 = vmatmul.f32.gmra.mxu0 %v356
        %v453 = vpop.f32.mrf.mxu0
        %v454 = vadd.f32 %v392, %v453
        %455 = vmatmul.f32.gmra.mxu0 %v357
        %v456 = vpop.f32.mrf.mxu0
        %v457 = vadd.f32 %v392, %v456
        %458 = vdwg.mxu0
        %vm459 = vcmp.gt.f32.partialorder %v412, 0.0
        %vm460 = vcmp.gt.f32.partialorder %v415, 0.0
        %vm461 = vcmp.gt.f32.partialorder %v418, 0.0
        %vm462 = vcmp.gt.f32.partialorder %v421, 0.0
        %vm463 = vcmp.gt.f32.partialorder %v424, 0.0
        %vm464 = vcmp.gt.f32.partialorder %v427, 0.0
        %vm465 = vcmp.gt.f32.partialorder %v430, 0.0
        %vm466 = vcmp.gt.f32.partialorder %v433, 0.0
        %vm467 = vcmp.gt.f32.partialorder %v436, 0.0
        %vm468 = vcmp.gt.f32.partialorder %v439, 0.0
        %vm469 = vcmp.gt.f32.partialorder %v442, 0.0
        %vm470 = vcmp.gt.f32.partialorder %v445, 0.0
        %vm471 = vcmp.gt.f32.partialorder %v448, 0.0
        %vm472 = vcmp.gt.f32.partialorder %v451, 0.0
        %vm473 = vcmp.gt.f32.partialorder %v454, 0.0
        %vm474 = vcmp.gt.f32.partialorder %v457, 0.0
        %v475 = vmul.f32 %v412, 0.01
        %v476 = vmul.f32 %v415, 0.01
        %v477 = vmul.f32 %v418, 0.01
        %v478 = vmul.f32 %v421, 0.01
        %v479 = vmul.f32 %v424, 0.01
        %v480 = vmul.f32 %v427, 0.01
        %v481 = vmul.f32 %v430, 0.01
        %v482 = vmul.f32 %v433, 0.01
        %v483 = vmul.f32 %v436, 0.01
        %v484 = vmul.f32 %v439, 0.01
        %v485 = vmul.f32 %v442, 0.01
        %v486 = vmul.f32 %v445, 0.01
        %v487 = vmul.f32 %v448, 0.01
        %v488 = vmul.f32 %v451, 0.01
        %v489 = vmul.f32 %v454, 0.01
        %v490 = vmul.f32 %v457, 0.01
        %v491 = vsel %vm459, %v412, %v475
        %v492 = vsel %vm460, %v415, %v476
        %v493 = vsel %vm461, %v418, %v477
        %v494 = vsel %vm462, %v421, %v478
        %v495 = vsel %vm463, %v424, %v479
        %v496 = vsel %vm464, %v427, %v480
        %v497 = vsel %vm465, %v430, %v481
        %v498 = vsel %vm466, %v433, %v482
        %v499 = vsel %vm467, %v436, %v483
        %v500 = vsel %vm468, %v439, %v484
        %v501 = vsel %vm469, %v442, %v485
        %v502 = vsel %vm470, %v445, %v486
        %v503 = vsel %vm471, %v448, %v487
        %v504 = vsel %vm472, %v451, %v488
        %v505 = vsel %vm473, %v454, %v489
        %v506 = vsel %vm474, %v457, %v490
        %v507 = vld [vmem:[#allocation2] sm:$0xff]
        %v508 = vld [vmem:[#allocation2 + $0x8] sm:$0xff]
        %v509 = vld [vmem:[#allocation2 + $0x10] sm:$0xff]
        %v510 = vld [vmem:[#allocation2 + $0x18] sm:$0xff]
        %v511 = vld [vmem:[#allocation2 + $0x20] sm:$0xff]
        %v512 = vld [vmem:[#allocation2 + $0x28] sm:$0xff]
        %v513 = vld [vmem:[#allocation2 + $0x30] sm:$0xff]
        %v514 = vld [vmem:[#allocation2 + $0x38] sm:$0xff]
        %v515 = vld [vmem:[#allocation2 + $0x40] sm:$0xff]
        %v516 = vld [vmem:[#allocation2 + $0x48] sm:$0xff]
        %v517 = vld [vmem:[#allocation2 + $0x50] sm:$0xff]
        %v518 = vld [vmem:[#allocation2 + $0x58] sm:$0xff]
        %v519 = vld [vmem:[#allocation2 + $0x60] sm:$0xff]
        %v520 = vld [vmem:[#allocation2 + $0x68] sm:$0xff]
        %v521 = vld [vmem:[#allocation2 + $0x70] sm:$0xff]
        %v522 = vld [vmem:[#allocation2 + $0x78] sm:$0xff]
        %523 = vmatpush.msra.mxu0 %v389
        %524 = vmatpush.msra.mxu0 %v388
        %525 = vmatpush.msra.mxu0 %v387
        %526 = vmatpush.msra.mxu0 %v386
        %527 = vmatpush.msra.mxu0 %v385
        %528 = vmatpush.msra.mxu0 %v384
        %529 = vmatpush.msra.mxu0 %v383
        %530 = vmatpush.msra.mxu0 %v382
        %531 = vmatpush.msra.mxu0 %v381
        %532 = vmatpush.msra.mxu0 %v380
        %533 = vmatpush.msra.mxu0 %v379
        %534 = vmatpush.msra.mxu0 %v378
        %535 = vmatpush.msra.mxu0 %v377
        %536 = vmatpush.msra.mxu0 %v376
        %537 = vmatpush.msra.mxu0 %v375
        %538 = vmatpush.msra.mxu0 %v374
        %539 = vmatmul.f32.gmra.mxu0 %v491
        %v540 = vpop.f32.mrf.mxu0
        %v541 = vadd.f32 0.0, %v540
        %542 = vmatmul.f32.gmra.mxu0 %v492
        %v543 = vpop.f32.mrf.mxu0
        %v544 = vadd.f32 0.0, %v543
        %545 = vmatmul.f32.gmra.mxu0 %v493
        %v546 = vpop.f32.mrf.mxu0
        %v547 = vadd.f32 0.0, %v546
        %548 = vmatmul.f32.gmra.mxu0 %v494
        %v549 = vpop.f32.mrf.mxu0
        %v550 = vadd.f32 0.0, %v549
        %551 = vmatmul.f32.gmra.mxu0 %v495
        %v552 = vpop.f32.mrf.mxu0
        %v553 = vadd.f32 0.0, %v552
        %554 = vmatmul.f32.gmra.mxu0 %v496
        %v555 = vpop.f32.mrf.mxu0
        %v556 = vadd.f32 0.0, %v555
        %557 = vmatmul.f32.gmra.mxu0 %v497
        %v558 = vpop.f32.mrf.mxu0
        %v559 = vadd.f32 0.0, %v558
        %560 = vmatmul.f32.gmra.mxu0 %v498
        %v561 = vpop.f32.mrf.mxu0
        %v562 = vadd.f32 0.0, %v561
        %563 = vmatmul.f32.gmra.mxu0 %v499
        %v564 = vpop.f32.mrf.mxu0
        %v565 = vadd.f32 0.0, %v564
        %566 = vmatmul.f32.gmra.mxu0 %v500
        %v567 = vpop.f32.mrf.mxu0
        %v568 = vadd.f32 0.0, %v567
        %569 = vmatmul.f32.gmra.mxu0 %v501
        %v570 = vpop.f32.mrf.mxu0
        %v571 = vadd.f32 0.0, %v570
        %572 = vmatmul.f32.gmra.mxu0 %v502
        %v573 = vpop.f32.mrf.mxu0
        %v574 = vadd.f32 0.0, %v573
        %575 = vmatmul.f32.gmra.mxu0 %v503
        %v576 = vpop.f32.mrf.mxu0
        %v577 = vadd.f32 0.0, %v576
        %578 = vmatmul.f32.gmra.mxu0 %v504
        %v579 = vpop.f32.mrf.mxu0
        %v580 = vadd.f32 0.0, %v579
        %581 = vmatmul.f32.gmra.mxu0 %v505
        %v582 = vpop.f32.mrf.mxu0
        %v583 = vadd.f32 0.0, %v582
        %584 = vmatmul.f32.gmra.mxu0 %v506
        %v585 = vpop.f32.mrf.mxu0
        %v586 = vadd.f32 0.0, %v585
        %587 = vdwg.mxu0
        %v588 = vadd.f32 %v507, %v541
        %v589 = vadd.f32 %v508, %v544
        %v590 = vadd.f32 %v509, %v547
        %v591 = vadd.f32 %v510, %v550
        %v592 = vadd.f32 %v511, %v553
        %v593 = vadd.f32 %v512, %v556
        %v594 = vadd.f32 %v513, %v559
        %v595 = vadd.f32 %v514, %v562
        %v596 = vadd.f32 %v515, %v565
        %v597 = vadd.f32 %v516, %v568
        %v598 = vadd.f32 %v517, %v571
        %v599 = vadd.f32 %v518, %v574
        %v600 = vadd.f32 %v519, %v577
        %v601 = vadd.f32 %v520, %v580
        %v602 = vadd.f32 %v521, %v583
        %v603 = vadd.f32 %v522, %v586
        %604 = vst [vmem:[#allocation2] sm:$0xff] %v588
        %605 = vst [vmem:[#allocation2 + $0x8] sm:$0xff] %v589
        %606 = vst [vmem:[#allocation2 + $0x10] sm:$0xff] %v590
        %607 = vst [vmem:[#allocation2 + $0x18] sm:$0xff] %v591
        %608 = vst [vmem:[#allocation2 + $0x20] sm:$0xff] %v592
        %609 = vst [vmem:[#allocation2 + $0x28] sm:$0xff] %v593
        %610 = vst [vmem:[#allocation2 + $0x30] sm:$0xff] %v594
        %611 = vst [vmem:[#allocation2 + $0x38] sm:$0xff] %v595
        %612 = vst [vmem:[#allocation2 + $0x40] sm:$0xff] %v596
        %613 = vst [vmem:[#allocation2 + $0x48] sm:$0xff] %v597
        %614 = vst [vmem:[#allocation2 + $0x50] sm:$0xff] %v598
        %615 = vst [vmem:[#allocation2 + $0x58] sm:$0xff] %v599
        %616 = vst [vmem:[#allocation2 + $0x60] sm:$0xff] %v600
        %617 = vst [vmem:[#allocation2 + $0x68] sm:$0xff] %v601
        %618 = vst [vmem:[#allocation2 + $0x70] sm:$0xff] %v602
        %619 = vst [vmem:[#allocation2 + $0x78] sm:$0xff] %v603
        // Predicated region
        $region57: #{tpu_custom_call.1} parent=39 // pred_check
          %p620 = pneg %p322
        $region58: #{tpu_custom_call.1} parent=39 // pred_check_branch
          %622 = sbr.rel (%p620) target = $region60
        $region59: #{tpu_custom_call.1} parent=39 // pred_region
          %v623 = vld [vmem:[#allocation2] sm:$0xff]
          %v624 = vld [vmem:[#allocation2 + $0x8] sm:$0xff]
          %v625 = vld [vmem:[#allocation2 + $0x10] sm:$0xff]
          %v626 = vld [vmem:[#allocation2 + $0x18] sm:$0xff]
          %v627 = vld [vmem:[#allocation2 + $0x20] sm:$0xff]
          %v628 = vld [vmem:[#allocation2 + $0x28] sm:$0xff]
          %v629 = vld [vmem:[#allocation2 + $0x30] sm:$0xff]
          %v630 = vld [vmem:[#allocation2 + $0x38] sm:$0xff]
          %v631 = vld [vmem:[#allocation2 + $0x40] sm:$0xff]
          %v632 = vld [vmem:[#allocation2 + $0x48] sm:$0xff]
          %v633 = vld [vmem:[#allocation2 + $0x50] sm:$0xff]
          %v634 = vld [vmem:[#allocation2 + $0x58] sm:$0xff]
          %v635 = vld [vmem:[#allocation2 + $0x60] sm:$0xff]
          %v636 = vld [vmem:[#allocation2 + $0x68] sm:$0xff]
          %v637 = vld [vmem:[#allocation2 + $0x70] sm:$0xff]
          %v638 = vld [vmem:[#allocation2 + $0x78] sm:$0xff]
          %v639 = vld [vmem:[%s4] sm:$0x1]
          %v641 = vperm.slane %v639, 0
          %v643 = vadd.f32 %v623, %v641
          %v644 = vadd.f32 %v624, %v641
          %v645 = vadd.f32 %v625, %v641
          %v646 = vadd.f32 %v626, %v641
          %v647 = vadd.f32 %v627, %v641
          %v648 = vadd.f32 %v628, %v641
          %v649 = vadd.f32 %v629, %v641
          %v650 = vadd.f32 %v630, %v641
          %v651 = vadd.f32 %v631, %v641
          %v652 = vadd.f32 %v632, %v641
          %v653 = vadd.f32 %v633, %v641
          %v654 = vadd.f32 %v634, %v641
          %v655 = vadd.f32 %v635, %v641
          %v656 = vadd.f32 %v636, %v641
          %v657 = vadd.f32 %v637, %v641
          %v658 = vadd.f32 %v638, %v641
          %vm659 = vcmp.gt.f32.partialorder %v643, 0.0
          %vm660 = vcmp.gt.f32.partialorder %v644, 0.0
          %vm661 = vcmp.gt.f32.partialorder %v645, 0.0
          %vm662 = vcmp.gt.f32.partialorder %v646, 0.0
          %vm663 = vcmp.gt.f32.partialorder %v647, 0.0
          %vm664 = vcmp.gt.f32.partialorder %v648, 0.0
          %vm665 = vcmp.gt.f32.partialorder %v649, 0.0
          %vm666 = vcmp.gt.f32.partialorder %v650, 0.0
          %vm667 = vcmp.gt.f32.partialorder %v651, 0.0
          %vm668 = vcmp.gt.f32.partialorder %v652, 0.0
          %vm669 = vcmp.gt.f32.partialorder %v653, 0.0
          %vm670 = vcmp.gt.f32.partialorder %v654, 0.0
          %vm671 = vcmp.gt.f32.partialorder %v655, 0.0
          %vm672 = vcmp.gt.f32.partialorder %v656, 0.0
          %vm673 = vcmp.gt.f32.partialorder %v657, 0.0
          %vm674 = vcmp.gt.f32.partialorder %v658, 0.0
          %v675 = vmul.f32 %v643, 0.01
          %v676 = vmul.f32 %v644, 0.01
          %v677 = vmul.f32 %v645, 0.01
          %v678 = vmul.f32 %v646, 0.01
          %v679 = vmul.f32 %v647, 0.01
          %v680 = vmul.f32 %v648, 0.01
          %v681 = vmul.f32 %v649, 0.01
          %v682 = vmul.f32 %v650, 0.01
          %v683 = vmul.f32 %v651, 0.01
          %v684 = vmul.f32 %v652, 0.01
          %v685 = vmul.f32 %v653, 0.01
          %v686 = vmul.f32 %v654, 0.01
          %v687 = vmul.f32 %v655, 0.01
          %v688 = vmul.f32 %v656, 0.01
          %v689 = vmul.f32 %v657, 0.01
          %v690 = vmul.f32 %v658, 0.01
          %v691 = vsel %vm659, %v643, %v675
          %v692 = vsel %vm660, %v644, %v676
          %v693 = vsel %vm661, %v645, %v677
          %v694 = vsel %vm662, %v646, %v678
          %v695 = vsel %vm663, %v647, %v679
          %v696 = vsel %vm664, %v648, %v680
          %v697 = vsel %vm665, %v649, %v681
          %v698 = vsel %vm666, %v650, %v682
          %v699 = vsel %vm667, %v651, %v683
          %v700 = vsel %vm668, %v652, %v684
          %v701 = vsel %vm669, %v653, %v685
          %v702 = vsel %vm670, %v654, %v686
          %v703 = vsel %vm671, %v655, %v687
          %v704 = vsel %vm672, %v656, %v688
          %v705 = vsel %vm673, %v657, %v689
          %v706 = vsel %vm674, %v658, %v690
          %707 = vst [vmem:[%s315] sm:$0xff] %v691
          %708 = vst [vmem:[%s315 + $0x8] sm:$0xff] %v692
          %709 = vst [vmem:[%s315 + $0x10] sm:$0xff] %v693
          %710 = vst [vmem:[%s315 + $0x18] sm:$0xff] %v694
          %711 = vst [vmem:[%s315 + $0x20] sm:$0xff] %v695
          %712 = vst [vmem:[%s315 + $0x28] sm:$0xff] %v696
          %713 = vst [vmem:[%s315 + $0x30] sm:$0xff] %v697
          %714 = vst [vmem:[%s315 + $0x38] sm:$0xff] %v698
          %715 = vst [vmem:[%s315 + $0x40] sm:$0xff] %v699
          %716 = vst [vmem:[%s315 + $0x48] sm:$0xff] %v700
          %717 = vst [vmem:[%s315 + $0x50] sm:$0xff] %v701
          %718 = vst [vmem:[%s315 + $0x58] sm:$0xff] %v702
          %719 = vst [vmem:[%s315 + $0x60] sm:$0xff] %v703
          %720 = vst [vmem:[%s315 + $0x68] sm:$0xff] %v704
          %721 = vst [vmem:[%s315 + $0x70] sm:$0xff] %v705
          %722 = vst [vmem:[%s315 + $0x78] sm:$0xff] %v706
        $region60: #{tpu_custom_call.1} parent=39 // pred_fallthru
          _
        %s723 = sand.u32 %s168, 1
        %s724 = scalar_lea.sflag [#allocation5], %s723
        %s725 = sand.u32 %s168, 1
        %s726 = smul.addr %s725, 128
        %s727 = scalar_lea.vmem [#allocation9], %s726
        // Predicated region
        $region61: #{tpu_custom_call.1} parent=39 // pred_check
          %p728 = pneg %p178
        $region62: #{tpu_custom_call.1} parent=39 // pred_check_branch
          %730 = sbr.rel (%p728) target = $region64
        $region63: #{tpu_custom_call.1} parent=39 // pred_region
          %s731 = smul.u32 16, %s27
          %733 = vsyncadd %s724, 0
          %s734 = smul.addr %s731, 8
          %s735 = scalar_lea.hbm %s5, %s734
          %s736 = sshll.u32 %s727, 4
          %s737 = int_to_ptr.vmem [resolvable:$true] %s736
          %s738 = sshll.u32 %s735, 4
          %s739 = int_to_ptr.hbm [resolvable:$true] %s738
          %744 = dma.vmem_to_hbm [thread:$0]  %s737, 2048, %s739, %s724, 128, 128, 8
        $region64: #{tpu_custom_call.1} parent=39 // pred_fallthru
          _
      $region40: #{tpu_custom_call.1} parent=5 // pred_fallthru
        _
      %p745 = scmp.le.s32.totalorder 2, %s18
      // Predicated region
      $region65: #{tpu_custom_call.1} parent=5 // pred_check
        %p746 = pneg %p745
      $region66: #{tpu_custom_call.1} parent=5 // pred_check_branch
        %748 = sbr.rel (%p746) target = $region68
      $region67: #{tpu_custom_call.1} parent=5 // pred_region
        %s749 = ssub.s32 %s18, 2
        // Predicated region
        $region69: #{tpu_custom_call.1} parent=67 // pred_check
          %p750 = pneg %p184
        $region70: #{tpu_custom_call.1} parent=67 // pred_check_branch
          %752 = sbr.rel (%p750) target = $region72
        $region71: #{tpu_custom_call.1} parent=67 // pred_region
          %s753 = sand.u32 %s169, 1
          %s754 = scalar_lea.sflag [#allocation5], %s753
          %s755 = sand.u32 %s169, 1
          %s756 = smul.addr %s755, 128
          %s757 = scalar_lea.vmem [#allocation9], %s756
          %759 = dma.done %s754, 2048
        $region72: #{tpu_custom_call.1} parent=67 // pred_fallthru
          _
      $region68: #{tpu_custom_call.1} parent=5 // pred_fallthru
        _
    $region6: #{tpu_custom_call.1} parent=1 // loop_footer
      %s22 = sadd.s32 1, %s18
    $region7: #{tpu_custom_call.1} parent=1 // loop_footer_branch
      %17 = sbr.rel target = $region3
    $region8: #{tpu_custom_call.1} parent=1 // loop_exit
      _
    %760 = vsyncpa [#allocation4], 1
    %s761 = scalar_lea.sflag [#allocation4], 1
    %762 = vsyncpa %s761, 1
    %763 = vsyncpa [#allocation7], 1
    %764 = vsyncpa [#allocation5], 1
    %s765 = scalar_lea.sflag [#allocation5], 1
    %766 = vsyncpa %s765, 1

// kernel: tpu_custom_call.1
$region0: #{tpu_custom_call.1}
  #allocation0 [shape = 'u32[]', space=smem, size = 0x4, offset = 0x4, fixed_abs, tag = 'smem constant byte address 0x4 - core index']
  #allocation1 [shape = 'u32[72,128]{1,0:T(1,128)}', space=vmem, size = 0x9000, scoped, tag = 'internal scratch']
  #allocation2 [shape = 'f32[128,128]{1,0:T(8,128)}', space=vmem, size = 0x10000, scoped, tag = 'scratch operand']
  %s0 = inlined_call_operand.hbm [shape: f32[256,128], index: 0, kind: input, shape index: {}]
  %s1 = inlined_call_operand.hbm [shape: f32[128,128], index: 1, kind: input, shape index: {}]
  %s2 = inlined_call_operand.vmem [shape: f32[1,128], index: 2, kind: input, shape index: {}]
  %s3 = inlined_call_operand.hbm [shape: f32[128,128], index: 3, kind: input, shape index: {}]
  %s4 = inlined_call_operand.vmem [shape: f32[1,128], index: 4, kind: input, shape index: {}]
  %s5 = inlined_call_operand.hbm [shape: f32[256,128], index: 5, kind: output, shape index: {}]
  %s6 = sld [smem:[#allocation0]]
  $region73: #{tpu_custom_call.1} parent=0
    _
  %s8 = ssub.s32 1, %s6
  %s9 = scalar_select 0, %s8, %s6
  $region1: #{tpu_custom_call.1} parent=0
    #allocation3 [shape = 'u8[131072]{0}', space=vmem, size = 0x20000, scoped, tag = 'input window, operand 0']
    #allocation4 [shape = 's32[2]{0}', space=sflag, size = 0x8, scoped, tag = 'scoped memory for tpu_custom_call.1']
    #allocation5 [shape = 's32[2]{0}', space=sflag, size = 0x8, scoped, tag = 'scoped memory for tpu_custom_call.1']
    #allocation6 [shape = 'u8[65536]{0}', space=vmem, size = 0x10000, scoped, tag = 'input window, operand 1, single buffered']
    #allocation7 [shape = 's32[1]{0}', space=sflag, size = 0x4, scoped, tag = 'scoped memory for tpu_custom_call.1']
    #allocation8 [shape = 'u8[65536]{0}', space=vmem, size = 0x10000, scoped, tag = 'input window, operand 3, single buffered']
    #allocation9 [shape = 'u8[131072]{0}', space=vmem, size = 0x20000, scoped, tag = 'output window, operand 0']
    %10 = vsyncpa [#allocation4], 0
    %s11 = scalar_lea.sflag [#allocation4], 1
    %12 = vsyncpa %s11, 0
    %13 = vsyncpa [#allocation7], 0
    %14 = vsyncpa [#allocation5], 0
    %s15 = scalar_lea.sflag [#allocation5], 1
    %16 = vsyncpa %s15, 0
    loop: start=0, step=1, limit=4
    $region2: #{tpu_custom_call.1} parent=1 // loop_pre_header
      _
    $region3: #{tpu_custom_call.1} parent=1 // loop_header
      %s18 = sphi 0, %s22
      %p19 = scmp.ge.s32.totalorder %s18, 4
      %s25 = sphi 0, %s37
      %s26 = sphi 0, %s33
      %s27 = sphi 0, %s25
      %s28 = sphi 0, %s26
      %s29 = sphi 0, %s27
      %s30 = sphi 0, %s28
      %s40 = sphi 0, %s42
      %s43 = sphi 0, %s40
      %s44 = sphi 0, %s43
      %s60 = sphi 0, %s44
      %s66 = sphi 0, %s68
      %s69 = sphi 0, %s66
      %s70 = sphi 0, %s69
      %s86 = sphi 0, %s70
      %s92 = sphi 0, %s94
      %s95 = sphi 0, %s92
      %s96 = sphi 0, %s95
      %s112 = sphi 0, %s96
      %s118 = sphi 0, %s120
      %s121 = sphi 0, %s118
      %s122 = sphi 0, %s121
      %s138 = sphi 0, %s122
      %s142 = sphi 0, %s142
      %s144 = sphi 0, %s142
      %s145 = sphi 0, %s144
      %s159 = sphi 0, %s145
      %s165 = sphi 0, %s167
      %s168 = sphi 0, %s165
      %s169 = sphi 0, %s168
      %s185 = sphi 0, %s169
    $region4: #{tpu_custom_call.1} parent=1 // loop_header_branch
      %21 = sbr.rel (%p19) target = $region8
    $region5: #{tpu_custom_call.1} parent=1 // loop_body
      %s23 = ssub.s32 %s18, 1
      %s24 = ssub.s32 %s18, 2
      %s31 = sadd.s32 1, %s26
      %p32 = scmp.ge.s32.totalorder %s31, 1
      %s33 = scalar_select %p32, 0, %s31
      %s34 = sadd.s32 1, %s25
      %s35 = scalar_select %p32, %s34, %s25
      %p36 = scmp.ge.s32.totalorder %s35, 2
      %s37 = scalar_select %p36, 0, %s35
      %s38 = ssub.s32 %s25, %s37
      %p39 = scmp.eq.s32.totalorder %s38, 0
      %s41 = sadd.s32 %s40, 1
      %s42 = scalar_select %p39, %s40, %s41
      %p45 = pneg %p39
      %p46 = scmp.eq.s32.totalorder %s18, 1
      %p47 = por %p45, %p46
      %p48 = scmp.ne.s32.totalorder %s40, %s43
      %p49 = scmp.eq.s32.totalorder %s18, 0
      %p50 = por %p48, %p49
      %p51 = scmp.ne.s32.totalorder %s40, %s43
      %p52 = scmp.eq.s32.totalorder %s23, 1
      %p53 = por %p51, %p52
      %p54 = scmp.ne.s32.totalorder %s43, %s44
      %p55 = scmp.eq.s32.totalorder %s23, 0
      %p56 = por %p54, %p55
      %p57 = scmp.ne.s32.totalorder %s43, %s44
      %p58 = scmp.eq.s32.totalorder %s24, 1
      %p59 = por %p57, %p58
      %p61 = scmp.ne.s32.totalorder %s44, %s60
      %p62 = scmp.eq.s32.totalorder %s24, 0
      %p63 = por %p61, %p62
      %s64 = ssub.s32 %s26, %s33
      %p65 = scmp.eq.s32.totalorder %s64, 0
      %s67 = sadd.s32 %s66, 1
      %s68 = scalar_select %p65, %s66, %s67
      %p71 = pneg %p65
      %p72 = scmp.eq.s32.totalorder %s18, 1
      %p73 = por %p71, %p72
      %p74 = scmp.ne.s32.totalorder %s66, %s69
      %p75 = scmp.eq.s32.totalorder %s18, 0
      %p76 = por %p74, %p75
      %p77 = scmp.ne.s32.totalorder %s66, %s69
      %p78 = scmp.eq.s32.totalorder %s23, 1
      %p79 = por %p77, %p78
      %p80 = scmp.ne.s32.totalorder %s69, %s70
      %p81 = scmp.eq.s32.totalorder %s23, 0
      %p82 = por %p80, %p81
      %p83 = scmp.ne.s32.totalorder %s69, %s70
      %p84 = scmp.eq.s32.totalorder %s24, 1
      %p85 = por %p83, %p84
      %p87 = scmp.ne.s32.totalorder %s70, %s86
      %p88 = scmp.eq.s32.totalorder %s24, 0
      %p89 = por %p87, %p88
      %s90 = ssub.s32 %s26, %s33
      %p91 = scmp.eq.s32.totalorder %s90, 0
      %s93 = sadd.s32 %s92, 1
      %s94 = scalar_select %p91, %s92, %s93
      %p97 = pneg %p91
      %p98 = scmp.eq.s32.totalorder %s18, 1
      %p99 = por %p97, %p98
      %p100 = scmp.ne.s32.totalorder %s92, %s95
      %p101 = scmp.eq.s32.totalorder %s18, 0
      %p102 = por %p100, %p101
      %p103 = scmp.ne.s32.totalorder %s92, %s95
      %p104 = scmp.eq.s32.totalorder %s23, 1
      %p105 = por %p103, %p104
      %p106 = scmp.ne.s32.totalorder %s95, %s96
      %p107 = scmp.eq.s32.totalorder %s23, 0
      %p108 = por %p106, %p107
      %p109 = scmp.ne.s32.totalorder %s95, %s96
      %p110 = scmp.eq.s32.totalorder %s24, 1
      %p111 = por %p109, %p110
      %p113 = scmp.ne.s32.totalorder %s96, %s112
      %p114 = scmp.eq.s32.totalorder %s24, 0
      %p115 = por %p113, %p114
      %s116 = ssub.s32 %s26, %s33
      %p117 = scmp.eq.s32.totalorder %s116, 0
      %s119 = sadd.s32 %s118, 1
      %s120 = scalar_select %p117, %s118, %s119
      %p123 = pneg %p117
      %p124 = scmp.eq.s32.totalorder %s18, 1
      %p125 = por %p123, %p124
      %p126 = scmp.ne.s32.totalorder %s118, %s121
      %p127 = scmp.eq.s32.totalorder %s18, 0
      %p128 = por %p126, %p127
      %p129 = scmp.ne.s32.totalorder %s118, %s121
      %p130 = scmp.eq.s32.totalorder %s23, 1
      %p131 = por %p129, %p130
      %p132 = scmp.ne.s32.totalorder %s121, %s122
      %p133 = scmp.eq.s32.totalorder %s23, 0
      %p134 = por %p132, %p133
      %p135 = scmp.ne.s32.totalorder %s121, %s122
      %p136 = scmp.eq.s32.totalorder %s24, 1
      %p137 = por %p135, %p136
      %p139 = scmp.ne.s32.totalorder %s122, %s138
      %p140 = scmp.eq.s32.totalorder %s24, 0
      %p141 = por %p139, %p140
      %s143 = sadd.s32 %s142, 1
      %p146 = scmp.eq.s32.totalorder %s18, 1
      %p147 = scmp.ne.s32.totalorder %s142, %s144
      %p148 = scmp.eq.s32.totalorder %s18, 0
      %p149 = por %p147, %p148
      %p150 = scmp.ne.s32.totalorder %s142, %s144
      %p151 = scmp.eq.s32.totalorder %s23, 1
      %p152 = por %p150, %p151
      %p153 = scmp.ne.s32.totalorder %s144, %s145
      %p154 = scmp.eq.s32.totalorder %s23, 0
      %p155 = por %p153, %p154
      %p156 = scmp.ne.s32.totalorder %s144, %s145
      %p157 = scmp.eq.s32.totalorder %s24, 1
      %p158 = por %p156, %p157
      %p160 = scmp.ne.s32.totalorder %s145, %s159
      %p161 = scmp.eq.s32.totalorder %s24, 0
      %p162 = por %p160, %p161
      %s163 = ssub.s32 %s25, %s37
      %p164 = scmp.eq.s32.totalorder %s163, 0
      %s166 = sadd.s32 %s165, 1
      %s167 = scalar_select %p164, %s165, %s166
      %p170 = pneg %p164
      %p171 = scmp.eq.s32.totalorder %s18, 1
      %p172 = por %p170, %p171
      %p173 = scmp.ne.s32.totalorder %s165, %s168
      %p174 = scmp.eq.s32.totalorder %s18, 0
      %p175 = por %p173, %p174
      %p176 = scmp.ne.s32.totalorder %s165, %s168
      %p177 = scmp.eq.s32.totalorder %s23, 1
      %p178 = por %p176, %p177
      %p179 = scmp.ne.s32.totalorder %s168, %s169
      %p180 = scmp.eq.s32.totalorder %s23, 0
      %p181 = por %p179, %p180
      %p182 = scmp.ne.s32.totalorder %s168, %s169
      %p183 = scmp.eq.s32.totalorder %s24, 1
      %p184 = por %p182, %p183
      %p186 = scmp.ne.s32.totalorder %s169, %s185
      %p187 = scmp.eq.s32.totalorder %s24, 0
      %p188 = por %p186, %p187
      %p189 = scmp.le.s32.totalorder 1, %s18
      %p190 = scmp.lt.s32.totalorder %s18, 3
      %p191 = pnand %p189, %p190
      %p192 = pneg %p191
      // Predicated region
      $region9: #{tpu_custom_call.1} parent=5 // pred_check
        _
      $region10: #{tpu_custom_call.1} parent=5 // pred_check_branch
        %194 = sbr.rel (%p191) target = $region12
      $region11: #{tpu_custom_call.1} parent=5 // pred_region
        %s195 = ssub.s32 %s18, 1
        // Predicated region
        $region13: #{tpu_custom_call.1} parent=11 // pred_check
          %p196 = pneg %p82
        $region14: #{tpu_custom_call.1} parent=11 // pred_check_branch
          %198 = sbr.rel (%p196) target = $region16
        $region15: #{tpu_custom_call.1} parent=11 // pred_region
          %200 = vsyncadd [#allocation7], 0
          %s201 = smul.addr %s28, 8
          %s202 = scalar_lea.hbm %s1, %s201
          %s203 = sshll.u32 %s202, 4
          %s204 = int_to_ptr.hbm [resolvable:$true] %s203
          %s205 = sshll.u32 [#allocation6], 4
          %s206 = int_to_ptr.vmem [resolvable:$true] %s205
          %211 = dma.hbm_to_vmem [thread:$0]  %s204, 2048, %s206, [#allocation7], 128, 128, 8
        $region16: #{tpu_custom_call.1} parent=11 // pred_fallthru
          _
        // Predicated region
        $region17: #{tpu_custom_call.1} parent=11 // pred_check
          %p212 = pneg %p108
        $region18: #{tpu_custom_call.1} parent=11 // pred_check_branch
          %214 = sbr.rel (%p212) target = $region20
        $region19: #{tpu_custom_call.1} parent=11 // pred_region
          %p215 = scmp.lt.s32.totalorder %s28, 0
          %s216 = scalar_select %p215, %s28, 0
          %s217 = scalar_lea.vmem %s2, %s216
        $region20: #{tpu_custom_call.1} parent=11 // pred_fallthru
          _
        // Predicated region
        $region21: #{tpu_custom_call.1} parent=11 // pred_check
          %p218 = pneg %p134
        $region22: #{tpu_custom_call.1} parent=11 // pred_check_branch
          %220 = sbr.rel (%p218) target = $region24
        $region23: #{tpu_custom_call.1} parent=11 // pred_region
          %s221 = smul.u32 16, %s28
          %223 = vsyncadd [#allocation7], 0
          %s224 = smul.addr %s221, 8
          %s225 = scalar_lea.hbm %s3, %s224
          %s226 = sshll.u32 %s225, 4
          %s227 = int_to_ptr.hbm [resolvable:$true] %s226
          %s228 = sshll.u32 [#allocation8], 4
          %s229 = int_to_ptr.vmem [resolvable:$true] %s228
          %234 = dma.hbm_to_vmem [thread:$0]  %s227, 2048, %s229, [#allocation7], 128, 128, 8
        $region24: #{tpu_custom_call.1} parent=11 // pred_fallthru
          _
        // Predicated region
        $region25: #{tpu_custom_call.1} parent=11 // pred_check
          %p235 = pneg %p155
        $region26: #{tpu_custom_call.1} parent=11 // pred_check_branch
          %237 = sbr.rel (%p235) target = $region28
        $region27: #{tpu_custom_call.1} parent=11 // pred_region
          _
        $region28: #{tpu_custom_call.1} parent=11 // pred_fallthru
          _
      $region12: #{tpu_custom_call.1} parent=5 // pred_fallthru
        _
      %p238 = scmp.lt.s32.totalorder %s18, 2
      // Predicated region
      $region29: #{tpu_custom_call.1} parent=5 // pred_check
        %p239 = pneg %p238
      $region30: #{tpu_custom_call.1} parent=5 // pred_check_branch
        %241 = sbr.rel (%p239) target = $region32
      $region31: #{tpu_custom_call.1} parent=5 // pred_region
        // Predicated region
        $region33: #{tpu_custom_call.1} parent=31 // pred_check
          %p242 = pneg %p50
        $region34: #{tpu_custom_call.1} parent=31 // pred_check_branch
          %244 = sbr.rel (%p242) target = $region36
        $region35: #{tpu_custom_call.1} parent=31 // pred_region
          %s245 = sand.u32 %s40, 1
          %s246 = scalar_lea.sflag [#allocation4], %s245
          %s247 = sand.u32 %s40, 1
          %s248 = smul.addr %s247, 128
          %s249 = scalar_lea.vmem [#allocation3], %s248
          %s250 = smul.u32 16, %s25
          %252 = vsyncadd %s246, 0
          %s253 = smul.addr %s250, 8
          %s254 = scalar_lea.hbm %s0, %s253
          %s255 = sshll.u32 %s254, 4
          %s256 = int_to_ptr.hbm [resolvable:$true] %s255
          %s257 = sshll.u32 %s249, 4
          %s258 = int_to_ptr.vmem [resolvable:$true] %s257
          %263 = dma.hbm_to_vmem [thread:$0]  %s256, 2048, %s258, %s246, 128, 128, 8
        $region36: #{tpu_custom_call.1} parent=31 // pred_fallthru
          _
      $region32: #{tpu_custom_call.1} parent=5 // pred_fallthru
        _
      %p264 = scmp.le.s32.totalorder 1, %s18
      %p265 = scmp.lt.s32.totalorder %s18, 3
      %p266 = pnand %p264, %p265
      %p267 = pneg %p266
      // Predicated region
      $region37: #{tpu_custom_call.1} parent=5 // pred_check
        _
      $region38: #{tpu_custom_call.1} parent=5 // pred_check_branch
        %269 = sbr.rel (%p266) target = $region40
      $region39: #{tpu_custom_call.1} parent=5 // pred_region
        %s270 = ssub.s32 %s18, 1
        %s271 = sand.u32 %s43, 1
        %s272 = scalar_lea.sflag [#allocation4], %s271
        %s273 = sand.u32 %s43, 1
        %s274 = smul.addr %s273, 128
        %s275 = scalar_lea.vmem [#allocation3], %s274
        // Predicated region
        $region41: #{tpu_custom_call.1} parent=39 // pred_check
          %p276 = pneg %p56
        $region42: #{tpu_custom_call.1} parent=39 // pred_check_branch
          %278 = sbr.rel (%p276) target = $region44
        $region43: #{tpu_custom_call.1} parent=39 // pred_region
          %280 = dma.done %s272, 2048
        $region44: #{tpu_custom_call.1} parent=39 // pred_fallthru
          _
        // Predicated region
        $region45: #{tpu_custom_call.1} parent=39 // pred_check
          %p281 = pneg %p82
        $region46: #{tpu_custom_call.1} parent=39 // pred_check_branch
          %283 = sbr.rel (%p281) target = $region48
        $region47: #{tpu_custom_call.1} parent=39 // pred_region
          %285 = dma.done [#allocation7], 2048
        $region48: #{tpu_custom_call.1} parent=39 // pred_fallthru
          _
        // Predicated region
        $region49: #{tpu_custom_call.1} parent=39 // pred_check
          %p286 = pneg %p134
        $region50: #{tpu_custom_call.1} parent=39 // pred_check_branch
          %288 = sbr.rel (%p286) target = $region52
        $region51: #{tpu_custom_call.1} parent=39 // pred_region
          %290 = dma.done [#allocation7], 2048
        $region52: #{tpu_custom_call.1} parent=39 // pred_fallthru
          _
        %s291 = sand.u32 %s43, 1
        %s292 = scalar_lea.sflag [#allocation4], %s291
        %s293 = sand.u32 %s43, 1
        %s294 = smul.addr %s293, 128
        %s295 = scalar_lea.vmem [#allocation3], %s294
        %p296 = pneg %p56
        %p297 = pneg %p53
        %p298 = pneg %p82
        %p299 = pneg %p79
        %p300 = scmp.lt.s32.totalorder %s28, 0
        %s301 = scalar_select %p300, %s28, 0
        %s302 = scalar_lea.vmem %s2, %s301
        %p303 = pneg %p108
        %p304 = pneg %p105
        %p305 = pneg %p134
        %p306 = pneg %p131
        %p307 = pneg %p155
        %p308 = pneg %p152
        %p309 = pneg %p181
        %p310 = pneg %p178
        %s311 = sand.u32 %s168, 1
        %s312 = scalar_lea.sflag [#allocation5], %s311
        %s313 = sand.u32 %s168, 1
        %s314 = smul.addr %s313, 128
        %s315 = scalar_lea.vmem [#allocation9], %s314
        %s316 = smul.u32 16, %s27
        %p317 = scmp.lt.s32.totalorder %s28, 0
        %s318 = scalar_select %p317, %s28, 0
        %s319 = scalar_lea.vmem %s2, %s318
        %s320 = smul.u32 16, %s28
        %s321 = smul.u32 16, %s27
        %p322 = scmp.eq.s32.totalorder %s28, 0
        // Predicated region
        $region53: #{tpu_custom_call.1} parent=39 // pred_check
          %p323 = pneg %p322
        $region54: #{tpu_custom_call.1} parent=39 // pred_check_branch
          %325 = sbr.rel (%p323) target = $region56
        $region55: #{tpu_custom_call.1} parent=39 // pred_region
          %326 = vst [vmem:[#allocation2] sm:$0xff] 0.0
          %327 = vst [vmem:[#allocation2 + $0x8] sm:$0xff] 0.0
          %328 = vst [vmem:[#allocation2 + $0x10] sm:$0xff] 0.0
          %329 = vst [vmem:[#allocation2 + $0x18] sm:$0xff] 0.0
          %330 = vst [vmem:[#allocation2 + $0x20] sm:$0xff] 0.0
          %331 = vst [vmem:[#allocation2 + $0x28] sm:$0xff] 0.0
          %332 = vst [vmem:[#allocation2 + $0x30] sm:$0xff] 0.0
          %333 = vst [vmem:[#allocation2 + $0x38] sm:$0xff] 0.0
          %334 = vst [vmem:[#allocation2 + $0x40] sm:$0xff] 0.0
          %335 = vst [vmem:[#allocation2 + $0x48] sm:$0xff] 0.0
          %336 = vst [vmem:[#allocation2 + $0x50] sm:$0xff] 0.0
          %337 = vst [vmem:[#allocation2 + $0x58] sm:$0xff] 0.0
          %338 = vst [vmem:[#allocation2 + $0x60] sm:$0xff] 0.0
          %339 = vst [vmem:[#allocation2 + $0x68] sm:$0xff] 0.0
          %340 = vst [vmem:[#allocation2 + $0x70] sm:$0xff] 0.0
          %341 = vst [vmem:[#allocation2 + $0x78] sm:$0xff] 0.0
        $region56: #{tpu_custom_call.1} parent=39 // pred_fallthru
          _
        %v342 = vld [vmem:[%s275] sm:$0xff]
        %v343 = vld [vmem:[%s275 + $0x8] sm:$0xff]
        %v344 = vld [vmem:[%s275 + $0x10] sm:$0xff]
        %v345 = vld [vmem:[%s275 + $0x18] sm:$0xff]
        %v346 = vld [vmem:[%s275 + $0x20] sm:$0xff]
        %v347 = vld [vmem:[%s275 + $0x28] sm:$0xff]
        %v348 = vld [vmem:[%s275 + $0x30] sm:$0xff]
        %v349 = vld [vmem:[%s275 + $0x38] sm:$0xff]
        %v350 = vld [vmem:[%s275 + $0x40] sm:$0xff]
        %v351 = vld [vmem:[%s275 + $0x48] sm:$0xff]
        %v352 = vld [vmem:[%s275 + $0x50] sm:$0xff]
        %v353 = vld [vmem:[%s275 + $0x58] sm:$0xff]
        %v354 = vld [vmem:[%s275 + $0x60] sm:$0xff]
        %v355 = vld [vmem:[%s275 + $0x68] sm:$0xff]
        %v356 = vld [vmem:[%s275 + $0x70] sm:$0xff]
        %v357 = vld [vmem:[%s275 + $0x78] sm:$0xff]
        %v358 = vld [vmem:[#allocation6] sm:$0xff]
        %v359 = vld [vmem:[#allocation6 + $0x8] sm:$0xff]
        %v360 = vld [vmem:[#allocation6 + $0x10] sm:$0xff]
        %v361 = vld [vmem:[#allocation6 + $0x18] sm:$0xff]
        %v362 = vld [vmem:[#allocation6 + $0x20] sm:$0xff]
        %v363 = vld [vmem:[#allocation6 + $0x28] sm:$0xff]
        %v364 = vld [vmem:[#allocation6 + $0x30] sm:$0xff]
        %v365 = vld [vmem:[#allocation6 + $0x38] sm:$0xff]
        %v366 = vld [vmem:[#allocation6 + $0x40] sm:$0xff]
        %v367 = vld [vmem:[#allocation6 + $0x48] sm:$0xff]
        %v368 = vld [vmem:[#allocation6 + $0x50] sm:$0xff]
        %v369 = vld [vmem:[#allocation6 + $0x58] sm:$0xff]
        %v370 = vld [vmem:[#allocation6 + $0x60] sm:$0xff]
        %v371 = vld [vmem:[#allocation6 + $0x68] sm:$0xff]
        %v372 = vld [vmem:[#allocation6 + $0x70] sm:$0xff]
        %v373 = vld [vmem:[#allocation6 + $0x78] sm:$0xff]
        %v374 = vld [vmem:[#allocation8] sm:$0xff]
        %v375 = vld [vmem:[#allocation8 + $0x8] sm:$0xff]
        %v376 = vld [vmem:[#allocation8 + $0x10] sm:$0xff]
        %v377 = vld [vmem:[#allocation8 + $0x18] sm:$0xff]
        %v378 = vld [vmem:[#allocation8 + $0x20] sm:$0xff]
        %v379 = vld [vmem:[#allocation8 + $0x28] sm:$0xff]
        %v380 = vld [vmem:[#allocation8 + $0x30] sm:$0xff]
        %v381 = vld [vmem:[#allocation8 + $0x38] sm:$0xff]
        %v382 = vld [vmem:[#allocation8 + $0x40] sm:$0xff]
        %v383 = vld [vmem:[#allocation8 + $0x48] sm:$0xff]
        %v384 = vld [vmem:[#allocation8 + $0x50] sm:$0xff]
        %v385 = vld [vmem:[#allocation8 + $0x58] sm:$0xff]
        %v386 = vld [vmem:[#allocation8 + $0x60] sm:$0xff]
        %v387 = vld [vmem:[#allocation8 + $0x68] sm:$0xff]
        %v388 = vld [vmem:[#allocation8 + $0x70] sm:$0xff]
        %v389 = vld [vmem:[#allocation8 + $0x78] sm:$0xff]
        %v390 = vld [vmem:[%s319] sm:$0x1]
        %v392 = vperm.slane %v390, 0
        %394 = vmatpush.msra.mxu0 %v373
        %395 = vmatpush.msra.mxu0 %v372
        %396 = vmatpush.msra.mxu0 %v371
        %397 = vmatpush.msra.mxu0 %v370
        %398 = vmatpush.msra.mxu0 %v369
        %399 = vmatpush.msra.mxu0 %v368
        %400 = vmatpush.msra.mxu0 %v367
        %401 = vmatpush.msra.mxu0 %v366
        %402 = vmatpush.msra.mxu0 %v365
        %403 = vmatpush.msra.mxu0 %v364
        %404 = vmatpush.msra.mxu0 %v363
        %405 = vmatpush.msra.mxu0 %v362
        %406 = vmatpush.msra.mxu0 %v361
        %407 = vmatpush.msra.mxu0 %v360
        %408 = vmatpush.msra.mxu0 %v359
        %409 = vmatpush.msra.mxu0 %v358
        %410 = vmatmul.f32.gmra.mxu0 %v342
        %v411 = vpop.f32.mrf.mxu0
        %v412 = vadd.f32 %v392, %v411
        %413 = vmatmul.f32.gmra.mxu0 %v343
        %v414 = vpop.f32.mrf.mxu0
        %v415 = vadd.f32 %v392, %v414
        %416 = vmatmul.f32.gmra.mxu0 %v344
        %v417 = vpop.f32.mrf.mxu0
        %v418 = vadd.f32 %v392, %v417
        %419 = vmatmul.f32.gmra.mxu0 %v345
        %v420 = vpop.f32.mrf.mxu0
        %v421 = vadd.f32 %v392, %v420
        %422 = vmatmul.f32.gmra.mxu0 %v346
        %v423 = vpop.f32.mrf.mxu0
        %v424 = vadd.f32 %v392, %v423
        %425 = vmatmul.f32.gmra.mxu0 %v347
        %v426 = vpop.f32.mrf.mxu0
        %v427 = vadd.f32 %v392, %v426
        %428 = vmatmul.f32.gmra.mxu0 %v348
        %v429 = vpop.f32.mrf.mxu0
        %v430 = vadd.f32 %v392, %v429
        %431 = vmatmul.f32.gmra.mxu0 %v349
        %v432 = vpop.f32.mrf.mxu0
        %v433 = vadd.f32 %v392, %v432
        %434 = vmatmul.f32.gmra.mxu0 %v350
        %v435 = vpop.f32.mrf.mxu0
        %v436 = vadd.f32 %v392, %v435
        %437 = vmatmul.f32.gmra.mxu0 %v351
        %v438 = vpop.f32.mrf.mxu0
        %v439 = vadd.f32 %v392, %v438
        %440 = vmatmul.f32.gmra.mxu0 %v352
        %v441 = vpop.f32.mrf.mxu0
        %v442 = vadd.f32 %v392, %v441
        %443 = vmatmul.f32.gmra.mxu0 %v353
        %v444 = vpop.f32.mrf.mxu0
        %v445 = vadd.f32 %v392, %v444
        %446 = vmatmul.f32.gmra.mxu0 %v354
        %v447 = vpop.f32.mrf.mxu0
        %v448 = vadd.f32 %v392, %v447
        %449 = vmatmul.f32.gmra.mxu0 %v355
        %v450 = vpop.f32.mrf.mxu0
        %v451 = vadd.f32 %v392, %v450
        %452 = vmatmul.f32.gmra.mxu0 %v356
        %v453 = vpop.f32.mrf.mxu0
        %v454 = vadd.f32 %v392, %v453
        %455 = vmatmul.f32.gmra.mxu0 %v357
        %v456 = vpop.f32.mrf.mxu0
        %v457 = vadd.f32 %v392, %v456
        %458 = vdwg.mxu0
        %vm459 = vcmp.gt.f32.partialorder %v412, 0.0
        %vm460 = vcmp.gt.f32.partialorder %v415, 0.0
        %vm461 = vcmp.gt.f32.partialorder %v418, 0.0
        %vm462 = vcmp.gt.f32.partialorder %v421, 0.0
        %vm463 = vcmp.gt.f32.partialorder %v424, 0.0
        %vm464 = vcmp.gt.f32.partialorder %v427, 0.0
        %vm465 = vcmp.gt.f32.partialorder %v430, 0.0
        %vm466 = vcmp.gt.f32.partialorder %v433, 0.0
        %vm467 = vcmp.gt.f32.partialorder %v436, 0.0
        %vm468 = vcmp.gt.f32.partialorder %v439, 0.0
        %vm469 = vcmp.gt.f32.partialorder %v442, 0.0
        %vm470 = vcmp.gt.f32.partialorder %v445, 0.0
        %vm471 = vcmp.gt.f32.partialorder %v448, 0.0
        %vm472 = vcmp.gt.f32.partialorder %v451, 0.0
        %vm473 = vcmp.gt.f32.partialorder %v454, 0.0
        %vm474 = vcmp.gt.f32.partialorder %v457, 0.0
        %v475 = vmul.f32 %v412, 0.01
        %v476 = vmul.f32 %v415, 0.01
        %v477 = vmul.f32 %v418, 0.01
        %v478 = vmul.f32 %v421, 0.01
        %v479 = vmul.f32 %v424, 0.01
        %v480 = vmul.f32 %v427, 0.01
        %v481 = vmul.f32 %v430, 0.01
        %v482 = vmul.f32 %v433, 0.01
        %v483 = vmul.f32 %v436, 0.01
        %v484 = vmul.f32 %v439, 0.01
        %v485 = vmul.f32 %v442, 0.01
        %v486 = vmul.f32 %v445, 0.01
        %v487 = vmul.f32 %v448, 0.01
        %v488 = vmul.f32 %v451, 0.01
        %v489 = vmul.f32 %v454, 0.01
        %v490 = vmul.f32 %v457, 0.01
        %v491 = vsel %vm459, %v412, %v475
        %v492 = vsel %vm460, %v415, %v476
        %v493 = vsel %vm461, %v418, %v477
        %v494 = vsel %vm462, %v421, %v478
        %v495 = vsel %vm463, %v424, %v479
        %v496 = vsel %vm464, %v427, %v480
        %v497 = vsel %vm465, %v430, %v481
        %v498 = vsel %vm466, %v433, %v482
        %v499 = vsel %vm467, %v436, %v483
        %v500 = vsel %vm468, %v439, %v484
        %v501 = vsel %vm469, %v442, %v485
        %v502 = vsel %vm470, %v445, %v486
        %v503 = vsel %vm471, %v448, %v487
        %v504 = vsel %vm472, %v451, %v488
        %v505 = vsel %vm473, %v454, %v489
        %v506 = vsel %vm474, %v457, %v490
        %v507 = vld [vmem:[#allocation2] sm:$0xff]
        %v508 = vld [vmem:[#allocation2 + $0x8] sm:$0xff]
        %v509 = vld [vmem:[#allocation2 + $0x10] sm:$0xff]
        %v510 = vld [vmem:[#allocation2 + $0x18] sm:$0xff]
        %v511 = vld [vmem:[#allocation2 + $0x20] sm:$0xff]
        %v512 = vld [vmem:[#allocation2 + $0x28] sm:$0xff]
        %v513 = vld [vmem:[#allocation2 + $0x30] sm:$0xff]
        %v514 = vld [vmem:[#allocation2 + $0x38] sm:$0xff]
        %v515 = vld [vmem:[#allocation2 + $0x40] sm:$0xff]
        %v516 = vld [vmem:[#allocation2 + $0x48] sm:$0xff]
        %v517 = vld [vmem:[#allocation2 + $0x50] sm:$0xff]
        %v518 = vld [vmem:[#allocation2 + $0x58] sm:$0xff]
        %v519 = vld [vmem:[#allocation2 + $0x60] sm:$0xff]
        %v520 = vld [vmem:[#allocation2 + $0x68] sm:$0xff]
        %v521 = vld [vmem:[#allocation2 + $0x70] sm:$0xff]
        %v522 = vld [vmem:[#allocation2 + $0x78] sm:$0xff]
        %523 = vmatpush.msra.mxu0 %v389
        %524 = vmatpush.msra.mxu0 %v388
        %525 = vmatpush.msra.mxu0 %v387
        %526 = vmatpush.msra.mxu0 %v386
        %527 = vmatpush.msra.mxu0 %v385
        %528 = vmatpush.msra.mxu0 %v384
        %529 = vmatpush.msra.mxu0 %v383
        %530 = vmatpush.msra.mxu0 %v382
        %531 = vmatpush.msra.mxu0 %v381
        %532 = vmatpush.msra.mxu0 %v380
        %533 = vmatpush.msra.mxu0 %v379
        %534 = vmatpush.msra.mxu0 %v378
        %535 = vmatpush.msra.mxu0 %v377
        %536 = vmatpush.msra.mxu0 %v376
        %537 = vmatpush.msra.mxu0 %v375
        %538 = vmatpush.msra.mxu0 %v374
        %539 = vmatmul.f32.gmra.mxu0 %v491
        %v540 = vpop.f32.mrf.mxu0
        %v541 = vadd.f32 0.0, %v540
        %542 = vmatmul.f32.gmra.mxu0 %v492
        %v543 = vpop.f32.mrf.mxu0
        %v544 = vadd.f32 0.0, %v543
        %545 = vmatmul.f32.gmra.mxu0 %v493
        %v546 = vpop.f32.mrf.mxu0
        %v547 = vadd.f32 0.0, %v546
        %548 = vmatmul.f32.gmra.mxu0 %v494
        %v549 = vpop.f32.mrf.mxu0
        %v550 = vadd.f32 0.0, %v549
        %551 = vmatmul.f32.gmra.mxu0 %v495
        %v552 = vpop.f32.mrf.mxu0
        %v553 = vadd.f32 0.0, %v552
        %554 = vmatmul.f32.gmra.mxu0 %v496
        %v555 = vpop.f32.mrf.mxu0
        %v556 = vadd.f32 0.0, %v555
        %557 = vmatmul.f32.gmra.mxu0 %v497
        %v558 = vpop.f32.mrf.mxu0
        %v559 = vadd.f32 0.0, %v558
        %560 = vmatmul.f32.gmra.mxu0 %v498
        %v561 = vpop.f32.mrf.mxu0
        %v562 = vadd.f32 0.0, %v561
        %563 = vmatmul.f32.gmra.mxu0 %v499
        %v564 = vpop.f32.mrf.mxu0
        %v565 = vadd.f32 0.0, %v564
        %566 = vmatmul.f32.gmra.mxu0 %v500
        %v567 = vpop.f32.mrf.mxu0
        %v568 = vadd.f32 0.0, %v567
        %569 = vmatmul.f32.gmra.mxu0 %v501
        %v570 = vpop.f32.mrf.mxu0
        %v571 = vadd.f32 0.0, %v570
        %572 = vmatmul.f32.gmra.mxu0 %v502
        %v573 = vpop.f32.mrf.mxu0
        %v574 = vadd.f32 0.0, %v573
        %575 = vmatmul.f32.gmra.mxu0 %v503
        %v576 = vpop.f32.mrf.mxu0
        %v577 = vadd.f32 0.0, %v576
        %578 = vmatmul.f32.gmra.mxu0 %v504
        %v579 = vpop.f32.mrf.mxu0
        %v580 = vadd.f32 0.0, %v579
        %581 = vmatmul.f32.gmra.mxu0 %v505
        %v582 = vpop.f32.mrf.mxu0
        %v583 = vadd.f32 0.0, %v582
        %584 = vmatmul.f32.gmra.mxu0 %v506
        %v585 = vpop.f32.mrf.mxu0
        %v586 = vadd.f32 0.0, %v585
        %587 = vdwg.mxu0
        %v588 = vadd.f32 %v507, %v541
        %v589 = vadd.f32 %v508, %v544
        %v590 = vadd.f32 %v509, %v547
        %v591 = vadd.f32 %v510, %v550
        %v592 = vadd.f32 %v511, %v553
        %v593 = vadd.f32 %v512, %v556
        %v594 = vadd.f32 %v513, %v559
        %v595 = vadd.f32 %v514, %v562
        %v596 = vadd.f32 %v515, %v565
        %v597 = vadd.f32 %v516, %v568
        %v598 = vadd.f32 %v517, %v571
        %v599 = vadd.f32 %v518, %v574
        %v600 = vadd.f32 %v519, %v577
        %v601 = vadd.f32 %v520, %v580
        %v602 = vadd.f32 %v521, %v583
        %v603 = vadd.f32 %v522, %v586
        %604 = vst [vmem:[#allocation2] sm:$0xff] %v588
        %605 = vst [vmem:[#allocation2 + $0x8] sm:$0xff] %v589
        %606 = vst [vmem:[#allocation2 + $0x10] sm:$0xff] %v590
        %607 = vst [vmem:[#allocation2 + $0x18] sm:$0xff] %v591
        %608 = vst [vmem:[#allocation2 + $0x20] sm:$0xff] %v592
        %609 = vst [vmem:[#allocation2 + $0x28] sm:$0xff] %v593
        %610 = vst [vmem:[#allocation2 + $0x30] sm:$0xff] %v594
        %611 = vst [vmem:[#allocation2 + $0x38] sm:$0xff] %v595
        %612 = vst [vmem:[#allocation2 + $0x40] sm:$0xff] %v596
        %613 = vst [vmem:[#allocation2 + $0x48] sm:$0xff] %v597
        %614 = vst [vmem:[#allocation2 + $0x50] sm:$0xff] %v598
        %615 = vst [vmem:[#allocation2 + $0x58] sm:$0xff] %v599
        %616 = vst [vmem:[#allocation2 + $0x60] sm:$0xff] %v600
        %617 = vst [vmem:[#allocation2 + $0x68] sm:$0xff] %v601
        %618 = vst [vmem:[#allocation2 + $0x70] sm:$0xff] %v602
        %619 = vst [vmem:[#allocation2 + $0x78] sm:$0xff] %v603
        // Predicated region
        $region57: #{tpu_custom_call.1} parent=39 // pred_check
          %p620 = pneg %p322
        $region58: #{tpu_custom_call.1} parent=39 // pred_check_branch
          %622 = sbr.rel (%p620) target = $region60
        $region59: #{tpu_custom_call.1} parent=39 // pred_region
          %v623 = vld [vmem:[#allocation2] sm:$0xff]
          %v624 = vld [vmem:[#allocation2 + $0x8] sm:$0xff]
          %v625 = vld [vmem:[#allocation2 + $0x10] sm:$0xff]
          %v626 = vld [vmem:[#allocation2 + $0x18] sm:$0xff]
          %v627 = vld [vmem:[#allocation2 + $0x20] sm:$0xff]
          %v628 = vld [vmem:[#allocation2 + $0x28] sm:$0xff]
          %v629 = vld [vmem:[#allocation2 + $0x30] sm:$0xff]
          %v630 = vld [vmem:[#allocation2 + $0x38] sm:$0xff]
          %v631 = vld [vmem:[#allocation2 + $0x40] sm:$0xff]
          %v632 = vld [vmem:[#allocation2 + $0x48] sm:$0xff]
          %v633 = vld [vmem:[#allocation2 + $0x50] sm:$0xff]
          %v634 = vld [vmem:[#allocation2 + $0x58] sm:$0xff]
          %v635 = vld [vmem:[#allocation2 + $0x60] sm:$0xff]
          %v636 = vld [vmem:[#allocation2 + $0x68] sm:$0xff]
          %v637 = vld [vmem:[#allocation2 + $0x70] sm:$0xff]
          %v638 = vld [vmem:[#allocation2 + $0x78] sm:$0xff]
          %v639 = vld [vmem:[%s4] sm:$0x1]
          %v641 = vperm.slane %v639, 0
          %v643 = vadd.f32 %v623, %v641
          %v644 = vadd.f32 %v624, %v641
          %v645 = vadd.f32 %v625, %v641
          %v646 = vadd.f32 %v626, %v641
          %v647 = vadd.f32 %v627, %v641
          %v648 = vadd.f32 %v628, %v641
          %v649 = vadd.f32 %v629, %v641
          %v650 = vadd.f32 %v630, %v641
          %v651 = vadd.f32 %v631, %v641
          %v652 = vadd.f32 %v632, %v641
          %v653 = vadd.f32 %v633, %v641
          %v654 = vadd.f32 %v634, %v641
          %v655 = vadd.f32 %v635, %v641
          %v656 = vadd.f32 %v636, %v641
          %v657 = vadd.f32 %v637, %v641
          %v658 = vadd.f32 %v638, %v641
          %vm659 = vcmp.gt.f32.partialorder %v643, 0.0
          %vm660 = vcmp.gt.f32.partialorder %v644, 0.0
          %vm661 = vcmp.gt.f32.partialorder %v645, 0.0
          %vm662 = vcmp.gt.f32.partialorder %v646, 0.0
          %vm663 = vcmp.gt.f32.partialorder %v647, 0.0
          %vm664 = vcmp.gt.f32.partialorder %v648, 0.0
          %vm665 = vcmp.gt.f32.partialorder %v649, 0.0
          %vm666 = vcmp.gt.f32.partialorder %v650, 0.0
          %vm667 = vcmp.gt.f32.partialorder %v651, 0.0
          %vm668 = vcmp.gt.f32.partialorder %v652, 0.0
          %vm669 = vcmp.gt.f32.partialorder %v653, 0.0
          %vm670 = vcmp.gt.f32.partialorder %v654, 0.0
          %vm671 = vcmp.gt.f32.partialorder %v655, 0.0
          %vm672 = vcmp.gt.f32.partialorder %v656, 0.0
          %vm673 = vcmp.gt.f32.partialorder %v657, 0.0
          %vm674 = vcmp.gt.f32.partialorder %v658, 0.0
          %v675 = vmul.f32 %v643, 0.01
          %v676 = vmul.f32 %v644, 0.01
          %v677 = vmul.f32 %v645, 0.01
          %v678 = vmul.f32 %v646, 0.01
          %v679 = vmul.f32 %v647, 0.01
          %v680 = vmul.f32 %v648, 0.01
          %v681 = vmul.f32 %v649, 0.01
          %v682 = vmul.f32 %v650, 0.01
          %v683 = vmul.f32 %v651, 0.01
          %v684 = vmul.f32 %v652, 0.01
          %v685 = vmul.f32 %v653, 0.01
          %v686 = vmul.f32 %v654, 0.01
          %v687 = vmul.f32 %v655, 0.01
          %v688 = vmul.f32 %v656, 0.01
          %v689 = vmul.f32 %v657, 0.01
          %v690 = vmul.f32 %v658, 0.01
          %v691 = vsel %vm659, %v643, %v675
          %v692 = vsel %vm660, %v644, %v676
          %v693 = vsel %vm661, %v645, %v677
          %v694 = vsel %vm662, %v646, %v678
          %v695 = vsel %vm663, %v647, %v679
          %v696 = vsel %vm664, %v648, %v680
          %v697 = vsel %vm665, %v649, %v681
          %v698 = vsel %vm666, %v650, %v682
          %v699 = vsel %vm667, %v651, %v683
          %v700 = vsel %vm668, %v652, %v684
          %v701 = vsel %vm669, %v653, %v685
          %v702 = vsel %vm670, %v654, %v686
          %v703 = vsel %vm671, %v655, %v687
          %v704 = vsel %vm672, %v656, %v688
          %v705 = vsel %vm673, %v657, %v689
          %v706 = vsel %vm674, %v658, %v690
          %707 = vst [vmem:[%s315] sm:$0xff] %v691
          %708 = vst [vmem:[%s315 + $0x8] sm:$0xff] %v692
          %709 = vst [vmem:[%s315 + $0x10] sm:$0xff] %v693
          %710 = vst [vmem:[%s315 + $0x18] sm:$0xff] %v694
          %711 = vst [vmem:[%s315 + $0x20] sm:$0xff] %v695
          %712 = vst [vmem:[%s315 + $0x28] sm:$0xff] %v696
          %713 = vst [vmem:[%s315 + $0x30] sm:$0xff] %v697
          %714 = vst [vmem:[%s315 + $0x38] sm:$0xff] %v698
          %715 = vst [vmem:[%s315 + $0x40] sm:$0xff] %v699
          %716 = vst [vmem:[%s315 + $0x48] sm:$0xff] %v700
          %717 = vst [vmem:[%s315 + $0x50] sm:$0xff] %v701
          %718 = vst [vmem:[%s315 + $0x58] sm:$0xff] %v702
          %719 = vst [vmem:[%s315 + $0x60] sm:$0xff] %v703
          %720 = vst [vmem:[%s315 + $0x68] sm:$0xff] %v704
          %721 = vst [vmem:[%s315 + $0x70] sm:$0xff] %v705
          %722 = vst [vmem:[%s315 + $0x78] sm:$0xff] %v706
        $region60: #{tpu_custom_call.1} parent=39 // pred_fallthru
          _
        %s723 = sand.u32 %s168, 1
        %s724 = scalar_lea.sflag [#allocation5], %s723
        %s725 = sand.u32 %s168, 1
        %s726 = smul.addr %s725, 128
        %s727 = scalar_lea.vmem [#allocation9], %s726
        // Predicated region
        $region61: #{tpu_custom_call.1} parent=39 // pred_check
          %p728 = pneg %p178
        $region62: #{tpu_custom_call.1} parent=39 // pred_check_branch
          %730 = sbr.rel (%p728) target = $region64
        $region63: #{tpu_custom_call.1} parent=39 // pred_region
          %s731 = smul.u32 16, %s27
          %733 = vsyncadd %s724, 0
          %s734 = smul.addr %s731, 8
          %s735 = scalar_lea.hbm %s5, %s734
          %s736 = sshll.u32 %s727, 4
          %s737 = int_to_ptr.vmem [resolvable:$true] %s736
          %s738 = sshll.u32 %s735, 4
          %s739 = int_to_ptr.hbm [resolvable:$true] %s738
          %744 = dma.vmem_to_hbm [thread:$0]  %s737, 2048, %s739, %s724, 128, 128, 8
        $region64: #{tpu_custom_call.1} parent=39 // pred_fallthru
          _
      $region40: #{tpu_custom_call.1} parent=5 // pred_fallthru
        _
      %p745 = scmp.le.s32.totalorder 2, %s18
      // Predicated region
      $region65: #{tpu_custom_call.1} parent=5 // pred_check
        %p746 = pneg %p745
      $region66: #{tpu_custom_call.1} parent=5 // pred_check_branch
        %748 = sbr.rel (%p746) target = $region68
      $region67: #{tpu_custom_call.1} parent=5 // pred_region
        %s749 = ssub.s32 %s18, 2
        // Predicated region
        $region69: #{tpu_custom_call.1} parent=67 // pred_check
          %p750 = pneg %p184
        $region70: #{tpu_custom_call.1} parent=67 // pred_check_branch
          %752 = sbr.rel (%p750) target = $region72
        $region71: #{tpu_custom_call.1} parent=67 // pred_region
          %s753 = sand.u32 %s169, 1
          %s754 = scalar_lea.sflag [#allocation5], %s753
          %s755 = sand.u32 %s169, 1
          %s756 = smul.addr %s755, 128
          %s757 = scalar_lea.vmem [#allocation9], %s756
          %759 = dma.done %s754, 2048
        $region72: #{tpu_custom_call.1} parent=67 // pred_fallthru
          _
      $region68: #{tpu_custom_call.1} parent=5 // pred_fallthru
        _
    $region6: #{tpu_custom_call.1} parent=1 // loop_footer
      %s22 = sadd.s32 1, %s18
    $region7: #{tpu_custom_call.1} parent=1 // loop_footer_branch
      %17 = sbr.rel target = $region3
    $region8: #{tpu_custom_call.1} parent=1 // loop_exit
      _
    %760 = vsyncpa [#allocation4], 1
    %s761 = scalar_lea.sflag [#allocation4], 1
    %762 = vsyncpa %s761, 1
    %763 = vsyncpa [#allocation7], 1
    %764 = vsyncpa [#allocation5], 1
    %s765 = scalar_lea.sflag [#allocation5], 1
    %766 = vsyncpa %s765, 1

</llo_original>
